<compile_context>
chip_gen: v7x
topology: tpu7x:2x2x1
jax: 0.10.0
libtpu: 0.0.40
codegen_flags: <defaults>
</compile_context>

<pallas_src>
import jax
import jax.numpy as jnp
from jax.experimental import pallas as pl
from jax.experimental.pallas import tpu as pltpu


def _gelu_tanh(x):
    # tanh-approximate GELU: 0.5*x*(1 + tanh(sqrt(2/pi)*(x + 0.044715*x^3)))
    c = 0.7978845608028654  # sqrt(2/pi)
    return 0.5 * x * (1.0 + jnp.tanh(c * (x + 0.044715 * x * x * x)))


def _mlp_kernel(x_ref, w1_ref, b1_ref, w2_ref, b2_ref, o_ref):
    # x_ref: (TM, C) f32, w1_ref: (C, Hd) bf16, b1_ref: (1, Hd) f32,
    # w2_ref: (Hd, C) bf16, b2_ref: (1, C) f32, o_ref: (TM, C) f32
    x = x_ref[...].astype(jnp.bfloat16)                       # VPU cast, cheap
    h = jnp.dot(x, w1_ref[...],
                preferred_element_type=jnp.float32) + b1_ref[...]
    h = _gelu_tanh(h)                                          # EUP tanh
    # TODO(synk): Dropout(p=0.0) is the identity; no RNG / masking emitted.
    y = jnp.dot(h.astype(jnp.bfloat16), w2_ref[...],
                preferred_element_type=jnp.float32) + b2_ref[...]
    o_ref[...] = y.astype(o_ref.dtype)


def mlp_forward(x, w1, b1, w2, b2, *, tm=128):
    """x: (B, L, C) float32 (channels-last token layout). Returns (B, L, C)."""
    B, L, C = x.shape
    Cin, Hd = w1.shape
    assert Cin == C and w2.shape == (Hd, C)

    M = B * L
    xm = x.reshape(M, C).astype(jnp.float32)

    # Pad the row (M) dimension up to a multiple of the row tile if needed.
    Mp = pl.cdiv(M, tm) * tm
    if Mp != M:
        xm = jnp.pad(xm, ((0, Mp - M), (0, 0)))

    # Pre-cast weights to bf16 once (halves weight VMEM, native MXU issue).
    w1b = w1.astype(jnp.bfloat16)
    w2b = w2.astype(jnp.bfloat16)
    b1r = b1.reshape(1, Hd).astype(jnp.float32)
    b2r = b2.reshape(1, C).astype(jnp.float32)

    grid = (Mp // tm,)
    out = pl.pallas_call(
        _mlp_kernel,
        out_shape=jax.ShapeDtypeStruct((Mp, C), jnp.float32),
        grid_spec=pltpu.PrefetchScalarGridSpec(
            num_scalar_prefetch=0,
            grid=grid,
            in_specs=[
                pl.BlockSpec((tm, C), lambda i: (i, 0)),   # activation row tile
                pl.BlockSpec((C, Hd), lambda i: (0, 0)),   # fc1 weight (resident)
                pl.BlockSpec((1, Hd), lambda i: (0, 0)),   # fc1 bias
                pl.BlockSpec((Hd, C), lambda i: (0, 0)),   # fc2 weight (resident)
                pl.BlockSpec((1, C), lambda i: (0, 0)),    # fc2 bias
            ],
            out_specs=pl.BlockSpec((tm, C), lambda i: (i, 0)),
        ),
        compiler_params=pltpu.CompilerParams(
            dimension_semantics=("parallel",),
        ),
    )(xm, w1b, b1r, w2b, b2r)

    if Mp != M:
        out = out[:M]
    return out.reshape(B, L, C)


def _reference(x, w1, b1, w2, b2):
    """Pure-JAX f32, exact-erf GELU reference of torch's Mlp.forward."""
    h = jax.nn.gelu(x @ w1 + b1, approximate=False)
    return h @ w2 + b2


if __name__ == "__main__":
    key = jax.random.PRNGKey(0)

    # Small shapes consistent with the module: (B, L, C) tokens, mlp_ratio=4.
    B, L, C = 2, 256, 128
    Hd = 4 * C

    k0, k1, k2, k3, k4 = jax.random.split(key, 5)
    x = jax.random.normal(k0, (B, L, C), jnp.float32)
    w1 = 0.02 * jax.random.normal(k1, (C, Hd), jnp.float32)
    b1 = 0.01 * jax.random.normal(k2, (Hd,), jnp.float32)
    w2 = 0.02 * jax.random.normal(k3, (Hd, C), jnp.float32)
    b2 = 0.01 * jax.random.normal(k4, (C,), jnp.float32)

    out = mlp_forward(x, w1, b1, w2, b2)
    jax.block_until_ready(out)
    assert out.shape == (B, L, C)

    ref = _reference(x, w1, b1, w2, b2)
    max_err = float(jnp.max(jnp.abs(out - ref)))
    assert max_err < 1e-2, f"mismatch vs reference: {max_err}"

    print("KERNEL_OK")
</pallas_src>

<mosaic_0001>
module attributes {stable_mosaic.version = 11 : i64} {
  func.func @_mlp_kernel(%arg0: i32, %arg1: memref<128x128xf32, #tpu.memory_space<vmem>>, %arg2: memref<128x512xbf16, #tpu.memory_space<vmem>>, %arg3: memref<1x512xf32, #tpu.memory_space<vmem>>, %arg4: memref<512x128xbf16, #tpu.memory_space<vmem>>, %arg5: memref<1x128xf32, #tpu.memory_space<vmem>>, %arg6: memref<128x128xf32, #tpu.memory_space<vmem>>) attributes {dimension_semantics = [#tpu.dimension_semantics<parallel>], iteration_bounds = array<i64: 4>, scalar_prefetch = 0 : i64, scratch_operands = 0 : i64, tpu.core_type = #tpu.core_type<tc>, window_params = [{transform_indices = @transform_0, window_bounds = array<i64: 128, 128>}, {pipeline_mode = #tpu.pipeline_mode<synchronous>, transform_indices = @transform_1, window_bounds = array<i64: 128, 512>}, {pipeline_mode = #tpu.pipeline_mode<synchronous>, transform_indices = @transform_2, window_bounds = array<i64: 1, 512>}, {pipeline_mode = #tpu.pipeline_mode<synchronous>, transform_indices = @transform_3, window_bounds = array<i64: 512, 128>}, {pipeline_mode = #tpu.pipeline_mode<synchronous>, transform_indices = @transform_4, window_bounds = array<i64: 1, 128>}, {transform_indices = @transform_5, window_bounds = array<i64: 128, 128>}]} {
    %c0 = arith.constant 0 : index
    %c0_0 = arith.constant 0 : index
    %0 = vector.load %arg1[%c0, %c0_0] : memref<128x128xf32, #tpu.memory_space<vmem>>, vector<128x128xf32>
    %1 = arith.truncf %0 : vector<128x128xf32> to vector<128x128xbf16>
    %c0_1 = arith.constant 0 : index
    %c0_2 = arith.constant 0 : index
    %2 = vector.load %arg2[%c0_1, %c0_2] : memref<128x512xbf16, #tpu.memory_space<vmem>>, vector<128x512xbf16>
    %cst = arith.constant dense<0.000000e+00> : vector<128x512xf32>
    %3 = tpu.matmul %1, %2, %cst {dimension_numbers = #tpu.dot_dimension_numbers<[1], [0], [0], [1], [0, 0, 1, 1], [], []>} : vector<128x128xbf16>, vector<128x512xbf16>, vector<128x512xf32> -> vector<128x512xf32>
    %c0_3 = arith.constant 0 : index
    %c0_4 = arith.constant 0 : index
    %4 = vector.load %arg3[%c0_3, %c0_4] : memref<1x512xf32, #tpu.memory_space<vmem>>, vector<1x512xf32>
    %5 = vector.broadcast %4 : vector<1x512xf32> to vector<128x512xf32>
    %6 = arith.addf %3, %5 : vector<128x512xf32>
    %cst_5 = arith.constant 5.000000e-01 : f32
    %7 = vector.broadcast %cst_5 : f32 to vector<128x512xf32>
    %8 = arith.mulf %7, %6 : vector<128x512xf32>
    %cst_6 = arith.constant 4.471500e-02 : f32
    %9 = vector.broadcast %cst_6 : f32 to vector<128x512xf32>
    %10 = arith.mulf %9, %6 : vector<128x512xf32>
    %11 = arith.mulf %10, %6 : vector<128x512xf32>
    %12 = arith.mulf %11, %6 : vector<128x512xf32>
    %13 = arith.addf %6, %12 : vector<128x512xf32>
    %cst_7 = arith.constant 0.797884583 : f32
    %14 = vector.broadcast %cst_7 : f32 to vector<128x512xf32>
    %15 = arith.mulf %14, %13 : vector<128x512xf32>
    %16 = math.tanh %15 : vector<128x512xf32>
    %cst_8 = arith.constant 1.000000e+00 : f32
    %17 = vector.broadcast %cst_8 : f32 to vector<128x512xf32>
    %18 = arith.addf %17, %16 : vector<128x512xf32>
    %19 = arith.mulf %8, %18 : vector<128x512xf32>
    %20 = arith.truncf %19 : vector<128x512xf32> to vector<128x512xbf16>
    %c0_9 = arith.constant 0 : index
    %c0_10 = arith.constant 0 : index
    %21 = vector.load %arg4[%c0_9, %c0_10] : memref<512x128xbf16, #tpu.memory_space<vmem>>, vector<512x128xbf16>
    %cst_11 = arith.constant dense<0.000000e+00> : vector<128x128xf32>
    %22 = tpu.matmul %20, %21, %cst_11 {dimension_numbers = #tpu.dot_dimension_numbers<[1], [0], [0], [1], [0, 0, 1, 1], [], []>} : vector<128x512xbf16>, vector<512x128xbf16>, vector<128x128xf32> -> vector<128x128xf32>
    %c0_12 = arith.constant 0 : index
    %c0_13 = arith.constant 0 : index
    %23 = vector.load %arg5[%c0_12, %c0_13] : memref<1x128xf32, #tpu.memory_space<vmem>>, vector<1x128xf32>
    %24 = vector.broadcast %23 : vector<1x128xf32> to vector<128x128xf32>
    %25 = arith.addf %22, %24 : vector<128x128xf32>
    %c0_14 = arith.constant 0 : index
    %c0_15 = arith.constant 0 : index
    %26 = vector.load %arg6[%c0_14, %c0_15] : memref<128x128xf32, #tpu.memory_space<vmem>>, vector<128x128xf32>
    tpu.vector_store %arg6[%c0_14, %c0_15], %25 {strides = array<i32>} : memref<128x128xf32, #tpu.memory_space<vmem>>, vector<128x128xf32>,
    return
  }
  func.func @transform_0(%arg0: i32) -> (i32, i32) {
    %c0_i32 = arith.constant 0 : i32
    %c0_i32_0 = arith.constant 0 : i32
    return %arg0, %c0_i32 : i32, i32
  }
  func.func @transform_1(%arg0: i32) -> (i32, i32) {
    %c0_i32 = arith.constant 0 : i32
    %c0_i32_0 = arith.constant 0 : i32
    %c0_i32_1 = arith.constant 0 : i32
    return %c0_i32, %c0_i32_0 : i32, i32
  }
  func.func @transform_2(%arg0: i32) -> (i32, i32) {
    %c0_i32 = arith.constant 0 : i32
    %c0_i32_0 = arith.constant 0 : i32
    %c0_i32_1 = arith.constant 0 : i32
    return %c0_i32, %c0_i32_0 : i32, i32
  }
  func.func @transform_3(%arg0: i32) -> (i32, i32) {
    %c0_i32 = arith.constant 0 : i32
    %c0_i32_0 = arith.constant 0 : i32
    %c0_i32_1 = arith.constant 0 : i32
    return %c0_i32, %c0_i32_0 : i32, i32
  }
  func.func @transform_4(%arg0: i32) -> (i32, i32) {
    %c0_i32 = arith.constant 0 : i32
    %c0_i32_0 = arith.constant 0 : i32
    %c0_i32_1 = arith.constant 0 : i32
    return %c0_i32, %c0_i32_0 : i32, i32
  }
  func.func @transform_5(%arg0: i32) -> (i32, i32) {
    %c0_i32 = arith.constant 0 : i32
    %c0_i32_0 = arith.constant 0 : i32
    return %arg0, %c0_i32 : i32, i32
  }
}

</mosaic_0001>

<llo_original>
// kernel: tpu_custom_call.1
$region0: #{tpu_custom_call.1}
  #allocation0 [shape = 'u32[]', space=smem, size = 0x4, offset = 0x4, fixed_abs, tag = 'smem constant byte address 0x4 - core index']
  #allocation1 [shape = 'u32[144,128]{1,0:T(1,128)}', space=vmem, size = 0x12000, scoped, tag = 'internal scratch']
  %s0 = inlined_call_operand.hbm [shape: f32[512,128], index: 0, kind: input, shape index: {}]
  %s1 = inlined_call_operand.hbm [shape: bf16[128,512], index: 1, kind: input, shape index: {}]
  %s2 = inlined_call_operand.vmem [shape: f32[1,512], index: 2, kind: input, shape index: {}]
  %s3 = inlined_call_operand.hbm [shape: bf16[512,128], index: 3, kind: input, shape index: {}]
  %s4 = inlined_call_operand.vmem [shape: f32[1,128], index: 4, kind: input, shape index: {}]
  %s5 = inlined_call_operand.hbm [shape: f32[512,128], index: 5, kind: output, shape index: {}]
  %s6 = sld [smem:[#allocation0]]
  $region65: #{tpu_custom_call.1} parent=0
    _
  %s8 = ssub.s32 1, %s6
  %s9 = scalar_select 0, %s8, %s6
  $region1: #{tpu_custom_call.1} parent=0
    #allocation2 [shape = 'u8[131072]{0}', space=vmem, size = 0x20000, scoped, tag = 'input window, operand 0']
    #allocation3 [shape = 's32[2]{0}', space=sflag, size = 0x8, scoped, tag = 'scoped memory for tpu_custom_call.1']
    #allocation4 [shape = 's32[2]{0}', space=sflag, size = 0x8, scoped, tag = 'scoped memory for tpu_custom_call.1']
    #allocation5 [shape = 'u8[131072]{0}', space=vmem, size = 0x20000, scoped, tag = 'input window, operand 1, single buffered']
    #allocation6 [shape = 's32[1]{0}', space=sflag, size = 0x4, scoped, tag = 'scoped memory for tpu_custom_call.1']
    #allocation7 [shape = 'u8[131072]{0}', space=vmem, size = 0x20000, scoped, tag = 'input window, operand 3, single buffered']
    #allocation8 [shape = 'u8[131072]{0}', space=vmem, size = 0x20000, scoped, tag = 'output window, operand 0']
    %10 = vsyncpa [#allocation3], 0
    %s11 = scalar_lea.sflag [#allocation3], 1
    %12 = vsyncpa %s11, 0
    %13 = vsyncpa [#allocation6], 0
    %14 = vsyncpa [#allocation4], 0
    %s15 = scalar_lea.sflag [#allocation4], 1
    %16 = vsyncpa %s15, 0
    loop: start=0, step=1, limit=6
    $region2: #{tpu_custom_call.1} parent=1 // loop_pre_header
      _
    $region3: #{tpu_custom_call.1} parent=1 // loop_header
      %s18 = sphi 0, %s22
      %p19 = scmp.ge.s32.totalorder %s18, 6
      %s28 = sphi 0, %s30
      %s31 = sphi 0, %s28
      %s32 = sphi 0, %s31
      %s48 = sphi 0, %s32
      %s52 = sphi 0, %s52
      %s54 = sphi 0, %s52
      %s55 = sphi 0, %s54
      %s69 = sphi 0, %s55
      %s73 = sphi 0, %s73
      %s75 = sphi 0, %s73
      %s76 = sphi 0, %s75
      %s90 = sphi 0, %s76
      %s94 = sphi 0, %s94
      %s96 = sphi 0, %s94
      %s97 = sphi 0, %s96
      %s111 = sphi 0, %s97
      %s115 = sphi 0, %s115
      %s117 = sphi 0, %s115
      %s118 = sphi 0, %s117
      %s132 = sphi 0, %s118
      %s138 = sphi 0, %s140
      %s141 = sphi 0, %s138
      %s142 = sphi 0, %s141
      %s158 = sphi 0, %s142
    $region4: #{tpu_custom_call.1} parent=1 // loop_header_branch
      %21 = sbr.rel (%p19) target = $region8
    $region5: #{tpu_custom_call.1} parent=1 // loop_body
      %s23 = ssub.s32 %s18, 1
      %s24 = ssub.s32 %s18, 2
      %s25 = sadd.s32 %s18, 1
      %s26 = ssub.s32 %s18, %s25
      %p27 = scmp.eq.s32.totalorder %s26, 0
      %s29 = sadd.s32 %s28, 1
      %s30 = scalar_select %p27, %s28, %s29
      %p33 = pneg %p27
      %p34 = scmp.eq.s32.totalorder %s18, 3
      %p35 = por %p33, %p34
      %p36 = scmp.ne.s32.totalorder %s28, %s31
      %p37 = scmp.eq.s32.totalorder %s18, 0
      %p38 = por %p36, %p37
      %p39 = scmp.ne.s32.totalorder %s28, %s31
      %p40 = scmp.eq.s32.totalorder %s23, 3
      %p41 = por %p39, %p40
      %p42 = scmp.ne.s32.totalorder %s31, %s32
      %p43 = scmp.eq.s32.totalorder %s23, 0
      %p44 = por %p42, %p43
      %p45 = scmp.ne.s32.totalorder %s31, %s32
      %p46 = scmp.eq.s32.totalorder %s24, 3
      %p47 = por %p45, %p46
      %p49 = scmp.ne.s32.totalorder %s32, %s48
      %p50 = scmp.eq.s32.totalorder %s24, 0
      %p51 = por %p49, %p50
      %s53 = sadd.s32 %s52, 1
      %p56 = scmp.eq.s32.totalorder %s18, 3
      %p57 = scmp.ne.s32.totalorder %s52, %s54
      %p58 = scmp.eq.s32.totalorder %s18, 0
      %p59 = por %p57, %p58
      %p60 = scmp.ne.s32.totalorder %s52, %s54
      %p61 = scmp.eq.s32.totalorder %s23, 3
      %p62 = por %p60, %p61
      %p63 = scmp.ne.s32.totalorder %s54, %s55
      %p64 = scmp.eq.s32.totalorder %s23, 0
      %p65 = por %p63, %p64
      %p66 = scmp.ne.s32.totalorder %s54, %s55
      %p67 = scmp.eq.s32.totalorder %s24, 3
      %p68 = por %p66, %p67
      %p70 = scmp.ne.s32.totalorder %s55, %s69
      %p71 = scmp.eq.s32.totalorder %s24, 0
      %p72 = por %p70, %p71
      %s74 = sadd.s32 %s73, 1
      %p77 = scmp.eq.s32.totalorder %s18, 3
      %p78 = scmp.ne.s32.totalorder %s73, %s75
      %p79 = scmp.eq.s32.totalorder %s18, 0
      %p80 = por %p78, %p79
      %p81 = scmp.ne.s32.totalorder %s73, %s75
      %p82 = scmp.eq.s32.totalorder %s23, 3
      %p83 = por %p81, %p82
      %p84 = scmp.ne.s32.totalorder %s75, %s76
      %p85 = scmp.eq.s32.totalorder %s23, 0
      %p86 = por %p84, %p85
      %p87 = scmp.ne.s32.totalorder %s75, %s76
      %p88 = scmp.eq.s32.totalorder %s24, 3
      %p89 = por %p87, %p88
      %p91 = scmp.ne.s32.totalorder %s76, %s90
      %p92 = scmp.eq.s32.totalorder %s24, 0
      %p93 = por %p91, %p92
      %s95 = sadd.s32 %s94, 1
      %p98 = scmp.eq.s32.totalorder %s18, 3
      %p99 = scmp.ne.s32.totalorder %s94, %s96
      %p100 = scmp.eq.s32.totalorder %s18, 0
      %p101 = por %p99, %p100
      %p102 = scmp.ne.s32.totalorder %s94, %s96
      %p103 = scmp.eq.s32.totalorder %s23, 3
      %p104 = por %p102, %p103
      %p105 = scmp.ne.s32.totalorder %s96, %s97
      %p106 = scmp.eq.s32.totalorder %s23, 0
      %p107 = por %p105, %p106
      %p108 = scmp.ne.s32.totalorder %s96, %s97
      %p109 = scmp.eq.s32.totalorder %s24, 3
      %p110 = por %p108, %p109
      %p112 = scmp.ne.s32.totalorder %s97, %s111
      %p113 = scmp.eq.s32.totalorder %s24, 0
      %p114 = por %p112, %p113
      %s116 = sadd.s32 %s115, 1
      %p119 = scmp.eq.s32.totalorder %s18, 3
      %p120 = scmp.ne.s32.totalorder %s115, %s117
      %p121 = scmp.eq.s32.totalorder %s18, 0
      %p122 = por %p120, %p121
      %p123 = scmp.ne.s32.totalorder %s115, %s117
      %p124 = scmp.eq.s32.totalorder %s23, 3
      %p125 = por %p123, %p124
      %p126 = scmp.ne.s32.totalorder %s117, %s118
      %p127 = scmp.eq.s32.totalorder %s23, 0
      %p128 = por %p126, %p127
      %p129 = scmp.ne.s32.totalorder %s117, %s118
      %p130 = scmp.eq.s32.totalorder %s24, 3
      %p131 = por %p129, %p130
      %p133 = scmp.ne.s32.totalorder %s118, %s132
      %p134 = scmp.eq.s32.totalorder %s24, 0
      %p135 = por %p133, %p134
      %s136 = ssub.s32 %s18, %s25
      %p137 = scmp.eq.s32.totalorder %s136, 0
      %s139 = sadd.s32 %s138, 1
      %s140 = scalar_select %p137, %s138, %s139
      %p143 = pneg %p137
      %p144 = scmp.eq.s32.totalorder %s18, 3
      %p145 = por %p143, %p144
      %p146 = scmp.ne.s32.totalorder %s138, %s141
      %p147 = scmp.eq.s32.totalorder %s18, 0
      %p148 = por %p146, %p147
      %p149 = scmp.ne.s32.totalorder %s138, %s141
      %p150 = scmp.eq.s32.totalorder %s23, 3
      %p151 = por %p149, %p150
      %p152 = scmp.ne.s32.totalorder %s141, %s142
      %p153 = scmp.eq.s32.totalorder %s23, 0
      %p154 = por %p152, %p153
      %p155 = scmp.ne.s32.totalorder %s141, %s142
      %p156 = scmp.eq.s32.totalorder %s24, 3
      %p157 = por %p155, %p156
      %p159 = scmp.ne.s32.totalorder %s142, %s158
      %p160 = scmp.eq.s32.totalorder %s24, 0
      %p161 = por %p159, %p160
      %p162 = scmp.le.s32.totalorder 1, %s18
      %p163 = scmp.lt.s32.totalorder %s18, 5
      %p164 = pnand %p162, %p163
      %p165 = pneg %p164
      // Predicated region
      $region9: #{tpu_custom_call.1} parent=5 // pred_check
        _
      $region10: #{tpu_custom_call.1} parent=5 // pred_check_branch
        %167 = sbr.rel (%p164) target = $region12
      $region11: #{tpu_custom_call.1} parent=5 // pred_region
        %s168 = ssub.s32 %s18, 1
        // Predicated region
        $region13: #{tpu_custom_call.1} parent=11 // pred_check
          %p169 = pneg %p65
        $region14: #{tpu_custom_call.1} parent=11 // pred_check_branch
          %171 = sbr.rel (%p169) target = $region16
        $region15: #{tpu_custom_call.1} parent=11 // pred_region
          %s173 = ssub.s32 4096, 4096
          %174 = vsyncadd [#allocation6], %s173
          %s175 = sshll.u32 [#allocation5], 4
          %s176 = int_to_ptr.vmem [resolvable:$true] %s175
          %181 = dma.hbm_to_vmem [thread:$0]  %s1, 4096, %s176, [#allocation6], 256, 256, 16
        $region16: #{tpu_custom_call.1} parent=11 // pred_fallthru
          _
        // Predicated region
        $region17: #{tpu_custom_call.1} parent=11 // pred_check
          %p182 = pneg %p86
        $region18: #{tpu_custom_call.1} parent=11 // pred_check_branch
          %184 = sbr.rel (%p182) target = $region20
        $region19: #{tpu_custom_call.1} parent=11 // pred_region
          _
        $region20: #{tpu_custom_call.1} parent=11 // pred_fallthru
          _
        // Predicated region
        $region21: #{tpu_custom_call.1} parent=11 // pred_check
          %p185 = pneg %p107
        $region22: #{tpu_custom_call.1} parent=11 // pred_check_branch
          %187 = sbr.rel (%p185) target = $region24
        $region23: #{tpu_custom_call.1} parent=11 // pred_region
          %s189 = ssub.s32 4096, 4096
          %190 = vsyncadd [#allocation6], %s189
          %s191 = sshll.u32 [#allocation7], 4
          %s192 = int_to_ptr.vmem [resolvable:$true] %s191
          %197 = dma.hbm_to_vmem [thread:$0]  %s3, 4096, %s192, [#allocation6], 64, 64, 4
        $region24: #{tpu_custom_call.1} parent=11 // pred_fallthru
          _
        // Predicated region
        $region25: #{tpu_custom_call.1} parent=11 // pred_check
          %p198 = pneg %p128
        $region26: #{tpu_custom_call.1} parent=11 // pred_check_branch
          %200 = sbr.rel (%p198) target = $region28
        $region27: #{tpu_custom_call.1} parent=11 // pred_region
          _
        $region28: #{tpu_custom_call.1} parent=11 // pred_fallthru
          _
      $region12: #{tpu_custom_call.1} parent=5 // pred_fallthru
        _
      %p201 = scmp.lt.s32.totalorder %s18, 4
      // Predicated region
      $region29: #{tpu_custom_call.1} parent=5 // pred_check
        %p202 = pneg %p201
      $region30: #{tpu_custom_call.1} parent=5 // pred_check_branch
        %204 = sbr.rel (%p202) target = $region32
      $region31: #{tpu_custom_call.1} parent=5 // pred_region
        // Predicated region
        $region33: #{tpu_custom_call.1} parent=31 // pred_check
          %p205 = pneg %p38
        $region34: #{tpu_custom_call.1} parent=31 // pred_check_branch
          %207 = sbr.rel (%p205) target = $region36
        $region35: #{tpu_custom_call.1} parent=31 // pred_region
          %s208 = sand.u32 %s28, 1
          %s209 = scalar_lea.sflag [#allocation3], %s208
          %s210 = sand.u32 %s28, 1
          %s211 = smul.addr %s210, 128
          %s212 = scalar_lea.vmem [#allocation2], %s211
          %s213 = smul.u32 16, %s18
          %s215 = ssub.s32 2048, 2048
          %216 = vsyncadd %s209, %s215
          %s217 = smul.addr %s213, 128
          %s218 = scalar_lea.hbm %s0, %s217
          %s219 = sshll.u32 %s212, 4
          %s220 = int_to_ptr.vmem [resolvable:$true] %s219
          %225 = dma.hbm_to_vmem [thread:$0]  %s218, 2048, %s220, %s209, 128, 128, 8
        $region36: #{tpu_custom_call.1} parent=31 // pred_fallthru
          _
      $region32: #{tpu_custom_call.1} parent=5 // pred_fallthru
        _
      %p226 = scmp.le.s32.totalorder 1, %s18
      %p227 = scmp.lt.s32.totalorder %s18, 5
      %p228 = pnand %p226, %p227
      %p229 = pneg %p228
      // Predicated region
      $region37: #{tpu_custom_call.1} parent=5 // pred_check
        _
      $region38: #{tpu_custom_call.1} parent=5 // pred_check_branch
        %231 = sbr.rel (%p228) target = $region40
      $region39: #{tpu_custom_call.1} parent=5 // pred_region
        %s232 = ssub.s32 %s18, 1
        %s233 = sand.u32 %s31, 1
        %s234 = scalar_lea.sflag [#allocation3], %s233
        %s235 = sand.u32 %s31, 1
        %s236 = smul.addr %s235, 128
        %s237 = scalar_lea.vmem [#allocation2], %s236
        // Predicated region
        $region41: #{tpu_custom_call.1} parent=39 // pred_check
          %p238 = pneg %p44
        $region42: #{tpu_custom_call.1} parent=39 // pred_check_branch
          %240 = sbr.rel (%p238) target = $region44
        $region43: #{tpu_custom_call.1} parent=39 // pred_region
          %241 = dma.done %s234, 2048
        $region44: #{tpu_custom_call.1} parent=39 // pred_fallthru
          _
        // Predicated region
        $region45: #{tpu_custom_call.1} parent=39 // pred_check
          %p242 = pneg %p65
        $region46: #{tpu_custom_call.1} parent=39 // pred_check_branch
          %244 = sbr.rel (%p242) target = $region48
        $region47: #{tpu_custom_call.1} parent=39 // pred_region
          %245 = dma.done [#allocation6], 4096
        $region48: #{tpu_custom_call.1} parent=39 // pred_fallthru
          _
        // Predicated region
        $region49: #{tpu_custom_call.1} parent=39 // pred_check
          %p246 = pneg %p107
        $region50: #{tpu_custom_call.1} parent=39 // pred_check_branch
          %248 = sbr.rel (%p246) target = $region52
        $region51: #{tpu_custom_call.1} parent=39 // pred_region
          %249 = dma.done [#allocation6], 4096
        $region52: #{tpu_custom_call.1} parent=39 // pred_fallthru
          _
        %s250 = sand.u32 %s31, 1
        %s251 = scalar_lea.sflag [#allocation3], %s250
        %s252 = sand.u32 %s31, 1
        %s253 = smul.addr %s252, 128
        %s254 = scalar_lea.vmem [#allocation2], %s253
        %p255 = pneg %p44
        %p256 = pneg %p41
        %p257 = pneg %p65
        %p258 = pneg %p62
        %p259 = pneg %p86
        %p260 = pneg %p83
        %p261 = pneg %p107
        %p262 = pneg %p104
        %p263 = pneg %p128
        %p264 = pneg %p125
        %p265 = pneg %p154
        %p266 = pneg %p151
        %s267 = sand.u32 %s141, 1
        %s268 = scalar_lea.sflag [#allocation4], %s267
        %s269 = sand.u32 %s141, 1
        %s270 = smul.addr %s269, 128
        %s271 = scalar_lea.vmem [#allocation8], %s270
        %s272 = smul.u32 16, %s23
        %s273 = smul.u32 16, %s23
        %v275 = vld [vmem:[%s237] sm:$0xff]
        %v276 = vld [vmem:[%s237 + $0x8] sm:$0xff]
        %v277 = vld [vmem:[%s237 + $0x10] sm:$0xff]
        %v278 = vld [vmem:[%s237 + $0x18] sm:$0xff]
        %v279 = vld [vmem:[%s237 + $0x20] sm:$0xff]
        %v280 = vld [vmem:[%s237 + $0x28] sm:$0xff]
        %v281 = vld [vmem:[%s237 + $0x30] sm:$0xff]
        %v282 = vld [vmem:[%s237 + $0x38] sm:$0xff]
        %v283 = vld [vmem:[%s237 + $0x40] sm:$0xff]
        %v284 = vld [vmem:[%s237 + $0x48] sm:$0xff]
        %v285 = vld [vmem:[%s237 + $0x50] sm:$0xff]
        %v286 = vld [vmem:[%s237 + $0x58] sm:$0xff]
        %v287 = vld [vmem:[%s237 + $0x60] sm:$0xff]
        %v288 = vld [vmem:[%s237 + $0x68] sm:$0xff]
        %v289 = vld [vmem:[%s237 + $0x70] sm:$0xff]
        %v290 = vld [vmem:[%s237 + $0x78] sm:$0xff]
        %v291 = vpack.c.bf16 %v276, %v275
        %v292 = vpack.c.bf16 %v278, %v277
        %v293 = vpack.c.bf16 %v280, %v279
        %v294 = vpack.c.bf16 %v282, %v281
        %v295 = vpack.c.bf16 %v284, %v283
        %v296 = vpack.c.bf16 %v286, %v285
        %v297 = vpack.c.bf16 %v288, %v287
        %v298 = vpack.c.bf16 %v290, %v289
        %v299 = vld [vmem:[#allocation5] sm:$0xff]
        %v300 = vld [vmem:[#allocation5 + $0x8] sm:$0xff]
        %v301 = vld [vmem:[#allocation5 + $0x10] sm:$0xff]
        %v302 = vld [vmem:[#allocation5 + $0x18] sm:$0xff]
        %v303 = vld [vmem:[#allocation5 + $0x20] sm:$0xff]
        %v304 = vld [vmem:[#allocation5 + $0x28] sm:$0xff]
        %v305 = vld [vmem:[#allocation5 + $0x30] sm:$0xff]
        %v306 = vld [vmem:[#allocation5 + $0x38] sm:$0xff]
        %v307 = vld [vmem:[#allocation5 + $0x40] sm:$0xff]
        %v308 = vld [vmem:[#allocation5 + $0x48] sm:$0xff]
        %v309 = vld [vmem:[#allocation5 + $0x50] sm:$0xff]
        %v310 = vld [vmem:[#allocation5 + $0x58] sm:$0xff]
        %v311 = vld [vmem:[#allocation5 + $0x60] sm:$0xff]
        %v312 = vld [vmem:[#allocation5 + $0x68] sm:$0xff]
        %v313 = vld [vmem:[#allocation5 + $0x70] sm:$0xff]
        %v314 = vld [vmem:[#allocation5 + $0x78] sm:$0xff]
        %v315 = vld [vmem:[#allocation5 + $0x80] sm:$0xff]
        %v316 = vld [vmem:[#allocation5 + $0x88] sm:$0xff]
        %v317 = vld [vmem:[#allocation5 + $0x90] sm:$0xff]
        %v318 = vld [vmem:[#allocation5 + $0x98] sm:$0xff]
        %v319 = vld [vmem:[#allocation5 + $0xa0] sm:$0xff]
        %v320 = vld [vmem:[#allocation5 + $0xa8] sm:$0xff]
        %v321 = vld [vmem:[#allocation5 + $0xb0] sm:$0xff]
        %v322 = vld [vmem:[#allocation5 + $0xb8] sm:$0xff]
        %v323 = vld [vmem:[#allocation5 + $0xc0] sm:$0xff]
        %v324 = vld [vmem:[#allocation5 + $0xc8] sm:$0xff]
        %v325 = vld [vmem:[#allocation5 + $0xd0] sm:$0xff]
        %v326 = vld [vmem:[#allocation5 + $0xd8] sm:$0xff]
        %v327 = vld [vmem:[#allocation5 + $0xe0] sm:$0xff]
        %v328 = vld [vmem:[#allocation5 + $0xe8] sm:$0xff]
        %v329 = vld [vmem:[#allocation5 + $0xf0] sm:$0xff]
        %v330 = vld [vmem:[#allocation5 + $0xf8] sm:$0xff]
        %v331 = vld [vmem:[%s2] sm:$0xf]
        %v333 = vlaneseq
        %v334 = vshrl.u32 %v333, 7
        %v335 = vsub.s32 0, %v334
        %v336 = vrot.slane %v331, %v335
        %v337 = vlaneseq
        %v338 = vshrl.u32 %v337, 7
        %v339 = vsub.s32 1, %v338
        %v340 = vrot.slane %v331, %v339
        %v341 = vlaneseq
        %v342 = vshrl.u32 %v341, 7
        %v343 = vsub.s32 2, %v342
        %v344 = vrot.slane %v331, %v343
        %v345 = vlaneseq
        %v346 = vshrl.u32 %v345, 7
        %v347 = vsub.s32 3, %v346
        %v348 = vrot.slane %v331, %v347
        %v385 = vunpack.c.l.b16 %v299
        %v386 = vunpack.c.h.b16 %v299
        %v387 = vunpack.c.l.b16 %v300
        %v388 = vunpack.c.h.b16 %v300
        %v389 = vunpack.c.l.b16 %v301
        %v390 = vunpack.c.h.b16 %v301
        %v391 = vunpack.c.l.b16 %v302
        %v392 = vunpack.c.h.b16 %v302
        %v393 = vunpack.c.l.b16 %v303
        %v394 = vunpack.c.h.b16 %v303
        %v395 = vunpack.c.l.b16 %v304
        %v396 = vunpack.c.h.b16 %v304
        %v397 = vunpack.c.l.b16 %v305
        %v398 = vunpack.c.h.b16 %v305
        %v399 = vunpack.c.l.b16 %v306
        %v400 = vunpack.c.h.b16 %v306
        %v401 = vunpack.c.l.b16 %v307
        %v402 = vunpack.c.h.b16 %v307
        %v403 = vunpack.c.l.b16 %v308
        %v404 = vunpack.c.h.b16 %v308
        %v405 = vunpack.c.l.b16 %v309
        %v406 = vunpack.c.h.b16 %v309
        %v407 = vunpack.c.l.b16 %v310
        %v408 = vunpack.c.h.b16 %v310
        %v409 = vunpack.c.l.b16 %v311
        %v410 = vunpack.c.h.b16 %v311
        %v411 = vunpack.c.l.b16 %v312
        %v412 = vunpack.c.h.b16 %v312
        %v413 = vunpack.c.l.b16 %v313
        %v414 = vunpack.c.h.b16 %v313
        %v415 = vunpack.c.l.b16 %v314
        %v416 = vunpack.c.h.b16 %v314
        %v417 = vunpack.c.l.b16 %v315
        %v418 = vunpack.c.h.b16 %v315
        %v419 = vunpack.c.l.b16 %v316
        %v420 = vunpack.c.h.b16 %v316
        %v421 = vunpack.c.l.b16 %v317
        %v422 = vunpack.c.h.b16 %v317
        %v423 = vunpack.c.l.b16 %v318
        %v424 = vunpack.c.h.b16 %v318
        %v425 = vunpack.c.l.b16 %v319
        %v426 = vunpack.c.h.b16 %v319
        %v427 = vunpack.c.l.b16 %v320
        %v428 = vunpack.c.h.b16 %v320
        %v429 = vunpack.c.l.b16 %v321
        %v430 = vunpack.c.h.b16 %v321
        %v431 = vunpack.c.l.b16 %v322
        %v432 = vunpack.c.h.b16 %v322
        %v433 = vunpack.c.l.b16 %v323
        %v434 = vunpack.c.h.b16 %v323
        %v435 = vunpack.c.l.b16 %v324
        %v436 = vunpack.c.h.b16 %v324
        %v437 = vunpack.c.l.b16 %v325
        %v438 = vunpack.c.h.b16 %v325
        %v439 = vunpack.c.l.b16 %v326
        %v440 = vunpack.c.h.b16 %v326
        %v441 = vunpack.c.l.b16 %v327
        %v442 = vunpack.c.h.b16 %v327
        %v443 = vunpack.c.l.b16 %v328
        %v444 = vunpack.c.h.b16 %v328
        %v445 = vunpack.c.l.b16 %v329
        %v446 = vunpack.c.h.b16 %v329
        %v447 = vunpack.c.l.b16 %v330
        %v448 = vunpack.c.h.b16 %v330
        %v449 = vpack.c.b16 %v389, %v385
        %v450 = vpack.c.b16 %v390, %v386
        %v451 = vpack.c.b16 %v391, %v387
        %v452 = vpack.c.b16 %v392, %v388
        %v453 = vpack.c.b16 %v397, %v393
        %v454 = vpack.c.b16 %v398, %v394
        %v455 = vpack.c.b16 %v399, %v395
        %v456 = vpack.c.b16 %v400, %v396
        %v457 = vpack.c.b16 %v405, %v401
        %v458 = vpack.c.b16 %v406, %v402
        %v459 = vpack.c.b16 %v407, %v403
        %v460 = vpack.c.b16 %v408, %v404
        %v461 = vpack.c.b16 %v413, %v409
        %v462 = vpack.c.b16 %v414, %v410
        %v463 = vpack.c.b16 %v415, %v411
        %v464 = vpack.c.b16 %v416, %v412
        %v465 = vpack.c.b16 %v421, %v417
        %v466 = vpack.c.b16 %v422, %v418
        %v467 = vpack.c.b16 %v423, %v419
        %v468 = vpack.c.b16 %v424, %v420
        %v469 = vpack.c.b16 %v429, %v425
        %v470 = vpack.c.b16 %v430, %v426
        %v471 = vpack.c.b16 %v431, %v427
        %v472 = vpack.c.b16 %v432, %v428
        %v473 = vpack.c.b16 %v437, %v433
        %v474 = vpack.c.b16 %v438, %v434
        %v475 = vpack.c.b16 %v439, %v435
        %v476 = vpack.c.b16 %v440, %v436
        %v477 = vpack.c.b16 %v445, %v441
        %v478 = vpack.c.b16 %v446, %v442
        %v479 = vpack.c.b16 %v447, %v443
        %v480 = vpack.c.b16 %v448, %v444
        %513 = vmatprep.subr.bf16.mxu0 %v450
        %514 = vmatpush1.bf16.msra.mxu0 %v449
        %515 = vmatprep.subr.bf16.mxu0 %v454
        %516 = vmatpush1.bf16.msra.mxu0 %v453
        %517 = vmatprep.subr.bf16.mxu0 %v458
        %518 = vmatpush1.bf16.msra.mxu0 %v457
        %519 = vmatprep.subr.bf16.mxu0 %v462
        %520 = vmatpush1.bf16.msra.mxu0 %v461
        %521 = vmatprep.subr.bf16.mxu0 %v466
        %522 = vmatpush1.bf16.msra.mxu0 %v465
        %523 = vmatprep.subr.bf16.mxu0 %v470
        %524 = vmatpush1.bf16.msra.mxu0 %v469
        %525 = vmatprep.subr.bf16.mxu0 %v474
        %526 = vmatpush1.bf16.msra.mxu0 %v473
        %527 = vmatprep.subr.bf16.mxu0 %v478
        %528 = vmatpush1.bf16.msra.mxu0 %v477
        %529 = vmatprep.subr.bf16.mxu0 0
        %530 = vmatpush1.bf16.msra.mxu0 0
        %531 = vmatprep.subr.bf16.mxu0 0
        %532 = vmatpush1.bf16.msra.mxu0 0
        %533 = vmatprep.subr.bf16.mxu0 0
        %534 = vmatpush1.bf16.msra.mxu0 0
        %535 = vmatprep.subr.bf16.mxu0 0
        %536 = vmatpush1.bf16.msra.mxu0 0
        %537 = vmatprep.subr.bf16.mxu0 0
        %538 = vmatpush1.bf16.msra.mxu0 0
        %539 = vmatprep.subr.bf16.mxu0 0
        %540 = vmatpush1.bf16.msra.mxu0 0
        %541 = vmatprep.subr.bf16.mxu0 0
        %542 = vmatpush1.bf16.msra.mxu0 0
        %543 = vmatprep.subr.bf16.mxu0 0
        %544 = vmatpush1.bf16.msra.mxu0 0
        %545 = vmatprep.mubr.bf16.mxu0 0
        %546 = vmatmul.mubr.bf16.gmra.mrb[0].mxu0 %v291
        %v547 = vpop.f32.mrb[0].mxu0
        %v548 = vadd.f32 %v336, %v547
        %v549 = vpop.f32.mrb[0].mxu0
        %v550 = vadd.f32 %v340, %v549
        %v551 = vpop.f32.mrb[0].mxu0
        %v552 = vadd.f32 %v336, %v551
        %v553 = vpop.f32.mrb[0].mxu0
        %v554 = vadd.f32 %v340, %v553
        %555 = vmatprep.mubr.bf16.mxu0 0
        %556 = vmatmul.mubr.bf16.gmra.mrb[0].mxu0 %v292
        %v557 = vpop.f32.mrb[0].mxu0
        %v558 = vadd.f32 %v336, %v557
        %v559 = vpop.f32.mrb[0].mxu0
        %v560 = vadd.f32 %v340, %v559
        %v561 = vpop.f32.mrb[0].mxu0
        %v562 = vadd.f32 %v336, %v561
        %v563 = vpop.f32.mrb[0].mxu0
        %v564 = vadd.f32 %v340, %v563
        %565 = vmatprep.mubr.bf16.mxu0 0
        %566 = vmatmul.mubr.bf16.gmra.mrb[0].mxu0 %v293
        %v567 = vpop.f32.mrb[0].mxu0
        %v568 = vadd.f32 %v336, %v567
        %v569 = vpop.f32.mrb[0].mxu0
        %v570 = vadd.f32 %v340, %v569
        %v571 = vpop.f32.mrb[0].mxu0
        %v572 = vadd.f32 %v336, %v571
        %v573 = vpop.f32.mrb[0].mxu0
        %v574 = vadd.f32 %v340, %v573
        %575 = vmatprep.mubr.bf16.mxu0 0
        %576 = vmatmul.mubr.bf16.gmra.mrb[0].mxu0 %v294
        %v577 = vpop.f32.mrb[0].mxu0
        %v578 = vadd.f32 %v336, %v577
        %v579 = vpop.f32.mrb[0].mxu0
        %v580 = vadd.f32 %v340, %v579
        %v581 = vpop.f32.mrb[0].mxu0
        %v582 = vadd.f32 %v336, %v581
        %v583 = vpop.f32.mrb[0].mxu0
        %v584 = vadd.f32 %v340, %v583
        %585 = vmatprep.mubr.bf16.mxu0 0
        %586 = vmatmul.mubr.bf16.gmra.mrb[0].mxu0 %v295
        %v587 = vpop.f32.mrb[0].mxu0
        %v588 = vadd.f32 %v336, %v587
        %v589 = vpop.f32.mrb[0].mxu0
        %v590 = vadd.f32 %v340, %v589
        %v591 = vpop.f32.mrb[0].mxu0
        %v592 = vadd.f32 %v336, %v591
        %v593 = vpop.f32.mrb[0].mxu0
        %v594 = vadd.f32 %v340, %v593
        %595 = vmatprep.mubr.bf16.mxu0 0
        %596 = vmatmul.mubr.bf16.gmra.mrb[0].mxu0 %v296
        %v597 = vpop.f32.mrb[0].mxu0
        %v598 = vadd.f32 %v336, %v597
        %v599 = vpop.f32.mrb[0].mxu0
        %v600 = vadd.f32 %v340, %v599
        %v601 = vpop.f32.mrb[0].mxu0
        %v602 = vadd.f32 %v336, %v601
        %v603 = vpop.f32.mrb[0].mxu0
        %v604 = vadd.f32 %v340, %v603
        %605 = vmatprep.mubr.bf16.mxu0 0
        %606 = vmatmul.mubr.bf16.gmra.mrb[0].mxu0 %v297
        %v607 = vpop.f32.mrb[0].mxu0
        %v608 = vadd.f32 %v336, %v607
        %v609 = vpop.f32.mrb[0].mxu0
        %v610 = vadd.f32 %v340, %v609
        %v611 = vpop.f32.mrb[0].mxu0
        %v612 = vadd.f32 %v336, %v611
        %v613 = vpop.f32.mrb[0].mxu0
        %v614 = vadd.f32 %v340, %v613
        %615 = vmatprep.mubr.bf16.mxu0 0
        %616 = vmatmul.mubr.bf16.gmra.mrb[0].mxu0 %v298
        %v617 = vpop.f32.mrb[0].mxu0
        %v618 = vadd.f32 %v336, %v617
        %v619 = vpop.f32.mrb[0].mxu0
        %v620 = vadd.f32 %v340, %v619
        %v621 = vpop.f32.mrb[0].mxu0
        %v622 = vadd.f32 %v336, %v621
        %v623 = vpop.f32.mrb[0].mxu0
        %v624 = vadd.f32 %v340, %v623
        %625 = vdwg.mxu0
        %626 = vmatprep.subr.bf16.mxu0 %v452
        %627 = vmatpush1.bf16.msra.mxu0 %v451
        %628 = vmatprep.subr.bf16.mxu0 %v456
        %629 = vmatpush1.bf16.msra.mxu0 %v455
        %630 = vmatprep.subr.bf16.mxu0 %v460
        %631 = vmatpush1.bf16.msra.mxu0 %v459
        %632 = vmatprep.subr.bf16.mxu0 %v464
        %633 = vmatpush1.bf16.msra.mxu0 %v463
        %634 = vmatprep.subr.bf16.mxu0 %v468
        %635 = vmatpush1.bf16.msra.mxu0 %v467
        %636 = vmatprep.subr.bf16.mxu0 %v472
        %637 = vmatpush1.bf16.msra.mxu0 %v471
        %638 = vmatprep.subr.bf16.mxu0 %v476
        %639 = vmatpush1.bf16.msra.mxu0 %v475
        %640 = vmatprep.subr.bf16.mxu0 %v480
        %641 = vmatpush1.bf16.msra.mxu0 %v479
        %642 = vmatprep.subr.bf16.mxu0 0
        %643 = vmatpush1.bf16.msra.mxu0 0
        %644 = vmatprep.subr.bf16.mxu0 0
        %645 = vmatpush1.bf16.msra.mxu0 0
        %646 = vmatprep.subr.bf16.mxu0 0
        %647 = vmatpush1.bf16.msra.mxu0 0
        %648 = vmatprep.subr.bf16.mxu0 0
        %649 = vmatpush1.bf16.msra.mxu0 0
        %650 = vmatprep.subr.bf16.mxu0 0
        %651 = vmatpush1.bf16.msra.mxu0 0
        %652 = vmatprep.subr.bf16.mxu0 0
        %653 = vmatpush1.bf16.msra.mxu0 0
        %654 = vmatprep.subr.bf16.mxu0 0
        %655 = vmatpush1.bf16.msra.mxu0 0
        %656 = vmatprep.subr.bf16.mxu0 0
        %657 = vmatpush1.bf16.msra.mxu0 0
        %658 = vmatprep.mubr.bf16.mxu0 0
        %659 = vmatmul.mubr.bf16.gmra.mrb[0].mxu0 %v291
        %v660 = vpop.f32.mrb[0].mxu0
        %v661 = vadd.f32 %v344, %v660
        %v662 = vpop.f32.mrb[0].mxu0
        %v663 = vadd.f32 %v348, %v662
        %v664 = vpop.f32.mrb[0].mxu0
        %v665 = vadd.f32 %v344, %v664
        %v666 = vpop.f32.mrb[0].mxu0
        %v667 = vadd.f32 %v348, %v666
        %668 = vmatprep.mubr.bf16.mxu0 0
        %669 = vmatmul.mubr.bf16.gmra.mrb[0].mxu0 %v292
        %v670 = vpop.f32.mrb[0].mxu0
        %v671 = vadd.f32 %v344, %v670
        %v672 = vpop.f32.mrb[0].mxu0
        %v673 = vadd.f32 %v348, %v672
        %v674 = vpop.f32.mrb[0].mxu0
        %v675 = vadd.f32 %v344, %v674
        %v676 = vpop.f32.mrb[0].mxu0
        %v677 = vadd.f32 %v348, %v676
        %678 = vmatprep.mubr.bf16.mxu0 0
        %679 = vmatmul.mubr.bf16.gmra.mrb[0].mxu0 %v293
        %v680 = vpop.f32.mrb[0].mxu0
        %v681 = vadd.f32 %v344, %v680
        %v682 = vpop.f32.mrb[0].mxu0
        %v683 = vadd.f32 %v348, %v682
        %v684 = vpop.f32.mrb[0].mxu0
        %v685 = vadd.f32 %v344, %v684
        %v686 = vpop.f32.mrb[0].mxu0
        %v687 = vadd.f32 %v348, %v686
        %688 = vmatprep.mubr.bf16.mxu0 0
        %689 = vmatmul.mubr.bf16.gmra.mrb[0].mxu0 %v294
        %v690 = vpop.f32.mrb[0].mxu0
        %v691 = vadd.f32 %v344, %v690
        %v692 = vpop.f32.mrb[0].mxu0
        %v693 = vadd.f32 %v348, %v692
        %v694 = vpop.f32.mrb[0].mxu0
        %v695 = vadd.f32 %v344, %v694
        %v696 = vpop.f32.mrb[0].mxu0
        %v697 = vadd.f32 %v348, %v696
        %698 = vmatprep.mubr.bf16.mxu0 0
        %699 = vmatmul.mubr.bf16.gmra.mrb[0].mxu0 %v295
        %v700 = vpop.f32.mrb[0].mxu0
        %v701 = vadd.f32 %v344, %v700
        %v702 = vpop.f32.mrb[0].mxu0
        %v703 = vadd.f32 %v348, %v702
        %v704 = vpop.f32.mrb[0].mxu0
        %v705 = vadd.f32 %v344, %v704
        %v706 = vpop.f32.mrb[0].mxu0
        %v707 = vadd.f32 %v348, %v706
        %708 = vmatprep.mubr.bf16.mxu0 0
        %709 = vmatmul.mubr.bf16.gmra.mrb[0].mxu0 %v296
        %v710 = vpop.f32.mrb[0].mxu0
        %v711 = vadd.f32 %v344, %v710
        %v712 = vpop.f32.mrb[0].mxu0
        %v713 = vadd.f32 %v348, %v712
        %v714 = vpop.f32.mrb[0].mxu0
        %v715 = vadd.f32 %v344, %v714
        %v716 = vpop.f32.mrb[0].mxu0
        %v717 = vadd.f32 %v348, %v716
        %718 = vmatprep.mubr.bf16.mxu0 0
        %719 = vmatmul.mubr.bf16.gmra.mrb[0].mxu0 %v297
        %v720 = vpop.f32.mrb[0].mxu0
        %v721 = vadd.f32 %v344, %v720
        %v722 = vpop.f32.mrb[0].mxu0
        %v723 = vadd.f32 %v348, %v722
        %v724 = vpop.f32.mrb[0].mxu0
        %v725 = vadd.f32 %v344, %v724
        %v726 = vpop.f32.mrb[0].mxu0
        %v727 = vadd.f32 %v348, %v726
        %728 = vmatprep.mubr.bf16.mxu0 0
        %729 = vmatmul.mubr.bf16.gmra.mrb[0].mxu0 %v298
        %v730 = vpop.f32.mrb[0].mxu0
        %v731 = vadd.f32 %v344, %v730
        %v732 = vpop.f32.mrb[0].mxu0
        %v733 = vadd.f32 %v348, %v732
        %v734 = vpop.f32.mrb[0].mxu0
        %v735 = vadd.f32 %v344, %v734
        %v736 = vpop.f32.mrb[0].mxu0
        %v737 = vadd.f32 %v348, %v736
        %738 = vdwg.mxu0
        %v739 = vmul.f32 %v548, 0.5
        %v740 = vmul.f32 %v550, 0.5
        %v741 = vmul.f32 %v661, 0.5
        %v742 = vmul.f32 %v663, 0.5
        %v743 = vmul.f32 %v552, 0.5
        %v744 = vmul.f32 %v554, 0.5
        %v745 = vmul.f32 %v665, 0.5
        %v746 = vmul.f32 %v667, 0.5
        %v747 = vmul.f32 %v558, 0.5
        %v748 = vmul.f32 %v560, 0.5
        %v749 = vmul.f32 %v671, 0.5
        %v750 = vmul.f32 %v673, 0.5
        %v751 = vmul.f32 %v562, 0.5
        %v752 = vmul.f32 %v564, 0.5
        %v753 = vmul.f32 %v675, 0.5
        %v754 = vmul.f32 %v677, 0.5
        %v755 = vmul.f32 %v568, 0.5
        %v756 = vmul.f32 %v570, 0.5
        %v757 = vmul.f32 %v681, 0.5
        %v758 = vmul.f32 %v683, 0.5
        %v759 = vmul.f32 %v572, 0.5
        %v760 = vmul.f32 %v574, 0.5
        %v761 = vmul.f32 %v685, 0.5
        %v762 = vmul.f32 %v687, 0.5
        %v763 = vmul.f32 %v578, 0.5
        %v764 = vmul.f32 %v580, 0.5
        %v765 = vmul.f32 %v691, 0.5
        %v766 = vmul.f32 %v693, 0.5
        %v767 = vmul.f32 %v582, 0.5
        %v768 = vmul.f32 %v584, 0.5
        %v769 = vmul.f32 %v695, 0.5
        %v770 = vmul.f32 %v697, 0.5
        %v771 = vmul.f32 %v588, 0.5
        %v772 = vmul.f32 %v590, 0.5
        %v773 = vmul.f32 %v701, 0.5
        %v774 = vmul.f32 %v703, 0.5
        %v775 = vmul.f32 %v592, 0.5
        %v776 = vmul.f32 %v594, 0.5
        %v777 = vmul.f32 %v705, 0.5
        %v778 = vmul.f32 %v707, 0.5
        %v779 = vmul.f32 %v598, 0.5
        %v780 = vmul.f32 %v600, 0.5
        %v781 = vmul.f32 %v711, 0.5
        %v782 = vmul.f32 %v713, 0.5
        %v783 = vmul.f32 %v602, 0.5
        %v784 = vmul.f32 %v604, 0.5
        %v785 = vmul.f32 %v715, 0.5
        %v786 = vmul.f32 %v717, 0.5
        %v787 = vmul.f32 %v608, 0.5
        %v788 = vmul.f32 %v610, 0.5
        %v789 = vmul.f32 %v721, 0.5
        %v790 = vmul.f32 %v723, 0.5
        %v791 = vmul.f32 %v612, 0.5
        %v792 = vmul.f32 %v614, 0.5
        %v793 = vmul.f32 %v725, 0.5
        %v794 = vmul.f32 %v727, 0.5
        %v795 = vmul.f32 %v618, 0.5
        %v796 = vmul.f32 %v620, 0.5
        %v797 = vmul.f32 %v731, 0.5
        %v798 = vmul.f32 %v733, 0.5
        %v799 = vmul.f32 %v622, 0.5
        %v800 = vmul.f32 %v624, 0.5
        %v801 = vmul.f32 %v735, 0.5
        %v802 = vmul.f32 %v737, 0.5
        %v803 = vmul.f32 %v548, 0.044715
        %v804 = vmul.f32 %v550, 0.044715
        %v805 = vmul.f32 %v661, 0.044715
        %v806 = vmul.f32 %v663, 0.044715
        %v807 = vmul.f32 %v552, 0.044715
        %v808 = vmul.f32 %v554, 0.044715
        %v809 = vmul.f32 %v665, 0.044715
        %v810 = vmul.f32 %v667, 0.044715
        %v811 = vmul.f32 %v558, 0.044715
        %v812 = vmul.f32 %v560, 0.044715
        %v813 = vmul.f32 %v671, 0.044715
        %v814 = vmul.f32 %v673, 0.044715
        %v815 = vmul.f32 %v562, 0.044715
        %v816 = vmul.f32 %v564, 0.044715
        %v817 = vmul.f32 %v675, 0.044715
        %v818 = vmul.f32 %v677, 0.044715
        %v819 = vmul.f32 %v568, 0.044715
        %v820 = vmul.f32 %v570, 0.044715
        %v821 = vmul.f32 %v681, 0.044715
        %v822 = vmul.f32 %v683, 0.044715
        %v823 = vmul.f32 %v572, 0.044715
        %v824 = vmul.f32 %v574, 0.044715
        %v825 = vmul.f32 %v685, 0.044715
        %v826 = vmul.f32 %v687, 0.044715
        %v827 = vmul.f32 %v578, 0.044715
        %v828 = vmul.f32 %v580, 0.044715
        %v829 = vmul.f32 %v691, 0.044715
        %v830 = vmul.f32 %v693, 0.044715
        %v831 = vmul.f32 %v582, 0.044715
        %v832 = vmul.f32 %v584, 0.044715
        %v833 = vmul.f32 %v695, 0.044715
        %v834 = vmul.f32 %v697, 0.044715
        %v835 = vmul.f32 %v588, 0.044715
        %v836 = vmul.f32 %v590, 0.044715
        %v837 = vmul.f32 %v701, 0.044715
        %v838 = vmul.f32 %v703, 0.044715
        %v839 = vmul.f32 %v592, 0.044715
        %v840 = vmul.f32 %v594, 0.044715
        %v841 = vmul.f32 %v705, 0.044715
        %v842 = vmul.f32 %v707, 0.044715
        %v843 = vmul.f32 %v598, 0.044715
        %v844 = vmul.f32 %v600, 0.044715
        %v845 = vmul.f32 %v711, 0.044715
        %v846 = vmul.f32 %v713, 0.044715
        %v847 = vmul.f32 %v602, 0.044715
        %v848 = vmul.f32 %v604, 0.044715
        %v849 = vmul.f32 %v715, 0.044715
        %v850 = vmul.f32 %v717, 0.044715
        %v851 = vmul.f32 %v608, 0.044715
        %v852 = vmul.f32 %v610, 0.044715
        %v853 = vmul.f32 %v721, 0.044715
        %v854 = vmul.f32 %v723, 0.044715
        %v855 = vmul.f32 %v612, 0.044715
        %v856 = vmul.f32 %v614, 0.044715
        %v857 = vmul.f32 %v725, 0.044715
        %v858 = vmul.f32 %v727, 0.044715
        %v859 = vmul.f32 %v618, 0.044715
        %v860 = vmul.f32 %v620, 0.044715
        %v861 = vmul.f32 %v731, 0.044715
        %v862 = vmul.f32 %v733, 0.044715
        %v863 = vmul.f32 %v622, 0.044715
        %v864 = vmul.f32 %v624, 0.044715
        %v865 = vmul.f32 %v735, 0.044715
        %v866 = vmul.f32 %v737, 0.044715
        %v867 = vmul.f32 %v803, %v548
        %v868 = vmul.f32 %v804, %v550
        %v869 = vmul.f32 %v805, %v661
        %v870 = vmul.f32 %v806, %v663
        %v871 = vmul.f32 %v807, %v552
        %v872 = vmul.f32 %v808, %v554
        %v873 = vmul.f32 %v809, %v665
        %v874 = vmul.f32 %v810, %v667
        %v875 = vmul.f32 %v811, %v558
        %v876 = vmul.f32 %v812, %v560
        %v877 = vmul.f32 %v813, %v671
        %v878 = vmul.f32 %v814, %v673
        %v879 = vmul.f32 %v815, %v562
        %v880 = vmul.f32 %v816, %v564
        %v881 = vmul.f32 %v817, %v675
        %v882 = vmul.f32 %v818, %v677
        %v883 = vmul.f32 %v819, %v568
        %v884 = vmul.f32 %v820, %v570
        %v885 = vmul.f32 %v821, %v681
        %v886 = vmul.f32 %v822, %v683
        %v887 = vmul.f32 %v823, %v572
        %v888 = vmul.f32 %v824, %v574
        %v889 = vmul.f32 %v825, %v685
        %v890 = vmul.f32 %v826, %v687
        %v891 = vmul.f32 %v827, %v578
        %v892 = vmul.f32 %v828, %v580
        %v893 = vmul.f32 %v829, %v691
        %v894 = vmul.f32 %v830, %v693
        %v895 = vmul.f32 %v831, %v582
        %v896 = vmul.f32 %v832, %v584
        %v897 = vmul.f32 %v833, %v695
        %v898 = vmul.f32 %v834, %v697
        %v899 = vmul.f32 %v835, %v588
        %v900 = vmul.f32 %v836, %v590
        %v901 = vmul.f32 %v837, %v701
        %v902 = vmul.f32 %v838, %v703
        %v903 = vmul.f32 %v839, %v592
        %v904 = vmul.f32 %v840, %v594
        %v905 = vmul.f32 %v841, %v705
        %v906 = vmul.f32 %v842, %v707
        %v907 = vmul.f32 %v843, %v598
        %v908 = vmul.f32 %v844, %v600
        %v909 = vmul.f32 %v845, %v711
        %v910 = vmul.f32 %v846, %v713
        %v911 = vmul.f32 %v847, %v602
        %v912 = vmul.f32 %v848, %v604
        %v913 = vmul.f32 %v849, %v715
        %v914 = vmul.f32 %v850, %v717
        %v915 = vmul.f32 %v851, %v608
        %v916 = vmul.f32 %v852, %v610
        %v917 = vmul.f32 %v853, %v721
        %v918 = vmul.f32 %v854, %v723
        %v919 = vmul.f32 %v855, %v612
        %v920 = vmul.f32 %v856, %v614
        %v921 = vmul.f32 %v857, %v725
        %v922 = vmul.f32 %v858, %v727
        %v923 = vmul.f32 %v859, %v618
        %v924 = vmul.f32 %v860, %v620
        %v925 = vmul.f32 %v861, %v731
        %v926 = vmul.f32 %v862, %v733
        %v927 = vmul.f32 %v863, %v622
        %v928 = vmul.f32 %v864, %v624
        %v929 = vmul.f32 %v865, %v735
        %v930 = vmul.f32 %v866, %v737
        %v931 = vmul.f32 %v867, %v548
        %v932 = vmul.f32 %v868, %v550
        %v933 = vmul.f32 %v869, %v661
        %v934 = vmul.f32 %v870, %v663
        %v935 = vmul.f32 %v871, %v552
        %v936 = vmul.f32 %v872, %v554
        %v937 = vmul.f32 %v873, %v665
        %v938 = vmul.f32 %v874, %v667
        %v939 = vmul.f32 %v875, %v558
        %v940 = vmul.f32 %v876, %v560
        %v941 = vmul.f32 %v877, %v671
        %v942 = vmul.f32 %v878, %v673
        %v943 = vmul.f32 %v879, %v562
        %v944 = vmul.f32 %v880, %v564
        %v945 = vmul.f32 %v881, %v675
        %v946 = vmul.f32 %v882, %v677
        %v947 = vmul.f32 %v883, %v568
        %v948 = vmul.f32 %v884, %v570
        %v949 = vmul.f32 %v885, %v681
        %v950 = vmul.f32 %v886, %v683
        %v951 = vmul.f32 %v887, %v572
        %v952 = vmul.f32 %v888, %v574
        %v953 = vmul.f32 %v889, %v685
        %v954 = vmul.f32 %v890, %v687
        %v955 = vmul.f32 %v891, %v578
        %v956 = vmul.f32 %v892, %v580
        %v957 = vmul.f32 %v893, %v691
        %v958 = vmul.f32 %v894, %v693
        %v959 = vmul.f32 %v895, %v582
        %v960 = vmul.f32 %v896, %v584
        %v961 = vmul.f32 %v897, %v695
        %v962 = vmul.f32 %v898, %v697
        %v963 = vmul.f32 %v899, %v588
        %v964 = vmul.f32 %v900, %v590
        %v965 = vmul.f32 %v901, %v701
        %v966 = vmul.f32 %v902, %v703
        %v967 = vmul.f32 %v903, %v592
        %v968 = vmul.f32 %v904, %v594
        %v969 = vmul.f32 %v905, %v705
        %v970 = vmul.f32 %v906, %v707
        %v971 = vmul.f32 %v907, %v598
        %v972 = vmul.f32 %v908, %v600
        %v973 = vmul.f32 %v909, %v711
        %v974 = vmul.f32 %v910, %v713
        %v975 = vmul.f32 %v911, %v602
        %v976 = vmul.f32 %v912, %v604
        %v977 = vmul.f32 %v913, %v715
        %v978 = vmul.f32 %v914, %v717
        %v979 = vmul.f32 %v915, %v608
        %v980 = vmul.f32 %v916, %v610
        %v981 = vmul.f32 %v917, %v721
        %v982 = vmul.f32 %v918, %v723
        %v983 = vmul.f32 %v919, %v612
        %v984 = vmul.f32 %v920, %v614
        %v985 = vmul.f32 %v921, %v725
        %v986 = vmul.f32 %v922, %v727
        %v987 = vmul.f32 %v923, %v618
        %v988 = vmul.f32 %v924, %v620
        %v989 = vmul.f32 %v925, %v731
        %v990 = vmul.f32 %v926, %v733
        %v991 = vmul.f32 %v927, %v622
        %v992 = vmul.f32 %v928, %v624
        %v993 = vmul.f32 %v929, %v735
        %v994 = vmul.f32 %v930, %v737
        %v995 = vadd.f32 %v548, %v931
        %v996 = vadd.f32 %v550, %v932
        %v997 = vadd.f32 %v661, %v933
        %v998 = vadd.f32 %v663, %v934
        %v999 = vadd.f32 %v552, %v935
        %v1000 = vadd.f32 %v554, %v936
        %v1001 = vadd.f32 %v665, %v937
        %v1002 = vadd.f32 %v667, %v938
        %v1003 = vadd.f32 %v558, %v939
        %v1004 = vadd.f32 %v560, %v940
        %v1005 = vadd.f32 %v671, %v941
        %v1006 = vadd.f32 %v673, %v942
        %v1007 = vadd.f32 %v562, %v943
        %v1008 = vadd.f32 %v564, %v944
        %v1009 = vadd.f32 %v675, %v945
        %v1010 = vadd.f32 %v677, %v946
        %v1011 = vadd.f32 %v568, %v947
        %v1012 = vadd.f32 %v570, %v948
        %v1013 = vadd.f32 %v681, %v949
        %v1014 = vadd.f32 %v683, %v950
        %v1015 = vadd.f32 %v572, %v951
        %v1016 = vadd.f32 %v574, %v952
        %v1017 = vadd.f32 %v685, %v953
        %v1018 = vadd.f32 %v687, %v954
        %v1019 = vadd.f32 %v578, %v955
        %v1020 = vadd.f32 %v580, %v956
        %v1021 = vadd.f32 %v691, %v957
        %v1022 = vadd.f32 %v693, %v958
        %v1023 = vadd.f32 %v582, %v959
        %v1024 = vadd.f32 %v584, %v960
        %v1025 = vadd.f32 %v695, %v961
        %v1026 = vadd.f32 %v697, %v962
        %v1027 = vadd.f32 %v588, %v963
        %v1028 = vadd.f32 %v590, %v964
        %v1029 = vadd.f32 %v701, %v965
        %v1030 = vadd.f32 %v703, %v966
        %v1031 = vadd.f32 %v592, %v967
        %v1032 = vadd.f32 %v594, %v968
        %v1033 = vadd.f32 %v705, %v969
        %v1034 = vadd.f32 %v707, %v970
        %v1035 = vadd.f32 %v598, %v971
        %v1036 = vadd.f32 %v600, %v972
        %v1037 = vadd.f32 %v711, %v973
        %v1038 = vadd.f32 %v713, %v974
        %v1039 = vadd.f32 %v602, %v975
        %v1040 = vadd.f32 %v604, %v976
        %v1041 = vadd.f32 %v715, %v977
        %v1042 = vadd.f32 %v717, %v978
        %v1043 = vadd.f32 %v608, %v979
        %v1044 = vadd.f32 %v610, %v980
        %v1045 = vadd.f32 %v721, %v981
        %v1046 = vadd.f32 %v723, %v982
        %v1047 = vadd.f32 %v612, %v983
        %v1048 = vadd.f32 %v614, %v984
        %v1049 = vadd.f32 %v725, %v985
        %v1050 = vadd.f32 %v727, %v986
        %v1051 = vadd.f32 %v618, %v987
        %v1052 = vadd.f32 %v620, %v988
        %v1053 = vadd.f32 %v731, %v989
        %v1054 = vadd.f32 %v733, %v990
        %v1055 = vadd.f32 %v622, %v991
        %v1056 = vadd.f32 %v624, %v992
        %v1057 = vadd.f32 %v735, %v993
        %v1058 = vadd.f32 %v737, %v994
        %v1059 = vmul.f32 %v995, 0.7978846
        %v1060 = vmul.f32 %v996, 0.7978846
        %v1061 = vmul.f32 %v997, 0.7978846
        %v1062 = vmul.f32 %v998, 0.7978846
        %v1063 = vmul.f32 %v999, 0.7978846
        %v1064 = vmul.f32 %v1000, 0.7978846
        %v1065 = vmul.f32 %v1001, 0.7978846
        %v1066 = vmul.f32 %v1002, 0.7978846
        %v1067 = vmul.f32 %v1003, 0.7978846
        %v1068 = vmul.f32 %v1004, 0.7978846
        %v1069 = vmul.f32 %v1005, 0.7978846
        %v1070 = vmul.f32 %v1006, 0.7978846
        %v1071 = vmul.f32 %v1007, 0.7978846
        %v1072 = vmul.f32 %v1008, 0.7978846
        %v1073 = vmul.f32 %v1009, 0.7978846
        %v1074 = vmul.f32 %v1010, 0.7978846
        %v1075 = vmul.f32 %v1011, 0.7978846
        %v1076 = vmul.f32 %v1012, 0.7978846
        %v1077 = vmul.f32 %v1013, 0.7978846
        %v1078 = vmul.f32 %v1014, 0.7978846
        %v1079 = vmul.f32 %v1015, 0.7978846
        %v1080 = vmul.f32 %v1016, 0.7978846
        %v1081 = vmul.f32 %v1017, 0.7978846
        %v1082 = vmul.f32 %v1018, 0.7978846
        %v1083 = vmul.f32 %v1019, 0.7978846
        %v1084 = vmul.f32 %v1020, 0.7978846
        %v1085 = vmul.f32 %v1021, 0.7978846
        %v1086 = vmul.f32 %v1022, 0.7978846
        %v1087 = vmul.f32 %v1023, 0.7978846
        %v1088 = vmul.f32 %v1024, 0.7978846
        %v1089 = vmul.f32 %v1025, 0.7978846
        %v1090 = vmul.f32 %v1026, 0.7978846
        %v1091 = vmul.f32 %v1027, 0.7978846
        %v1092 = vmul.f32 %v1028, 0.7978846
        %v1093 = vmul.f32 %v1029, 0.7978846
        %v1094 = vmul.f32 %v1030, 0.7978846
        %v1095 = vmul.f32 %v1031, 0.7978846
        %v1096 = vmul.f32 %v1032, 0.7978846
        %v1097 = vmul.f32 %v1033, 0.7978846
        %v1098 = vmul.f32 %v1034, 0.7978846
        %v1099 = vmul.f32 %v1035, 0.7978846
        %v1100 = vmul.f32 %v1036, 0.7978846
        %v1101 = vmul.f32 %v1037, 0.7978846
        %v1102 = vmul.f32 %v1038, 0.7978846
        %v1103 = vmul.f32 %v1039, 0.7978846
        %v1104 = vmul.f32 %v1040, 0.7978846
        %v1105 = vmul.f32 %v1041, 0.7978846
        %v1106 = vmul.f32 %v1042, 0.7978846
        %v1107 = vmul.f32 %v1043, 0.7978846
        %v1108 = vmul.f32 %v1044, 0.7978846
        %v1109 = vmul.f32 %v1045, 0.7978846
        %v1110 = vmul.f32 %v1046, 0.7978846
        %v1111 = vmul.f32 %v1047, 0.7978846
        %v1112 = vmul.f32 %v1048, 0.7978846
        %v1113 = vmul.f32 %v1049, 0.7978846
        %v1114 = vmul.f32 %v1050, 0.7978846
        %v1115 = vmul.f32 %v1051, 0.7978846
        %v1116 = vmul.f32 %v1052, 0.7978846
        %v1117 = vmul.f32 %v1053, 0.7978846
        %v1118 = vmul.f32 %v1054, 0.7978846
        %v1119 = vmul.f32 %v1055, 0.7978846
        %v1120 = vmul.f32 %v1056, 0.7978846
        %v1121 = vmul.f32 %v1057, 0.7978846
        %v1122 = vmul.f32 %v1058, 0.7978846
        %v1123 = vtanh.pop %v1059
        %v1124 = vtanh.pop %v1060
        %v1125 = vtanh.pop %v1061
        %v1126 = vtanh.pop %v1062
        %v1127 = vtanh.pop %v1063
        %v1128 = vtanh.pop %v1064
        %v1129 = vtanh.pop %v1065
        %v1130 = vtanh.pop %v1066
        %v1131 = vtanh.pop %v1067
        %v1132 = vtanh.pop %v1068
        %v1133 = vtanh.pop %v1069
        %v1134 = vtanh.pop %v1070
        %v1135 = vtanh.pop %v1071
        %v1136 = vtanh.pop %v1072
        %v1137 = vtanh.pop %v1073
        %v1138 = vtanh.pop %v1074
        %v1139 = vtanh.pop %v1075
        %v1140 = vtanh.pop %v1076
        %v1141 = vtanh.pop %v1077
        %v1142 = vtanh.pop %v1078
        %v1143 = vtanh.pop %v1079
        %v1144 = vtanh.pop %v1080
        %v1145 = vtanh.pop %v1081
        %v1146 = vtanh.pop %v1082
        %v1147 = vtanh.pop %v1083
        %v1148 = vtanh.pop %v1084
        %v1149 = vtanh.pop %v1085
        %v1150 = vtanh.pop %v1086
        %v1151 = vtanh.pop %v1087
        %v1152 = vtanh.pop %v1088
        %v1153 = vtanh.pop %v1089
        %v1154 = vtanh.pop %v1090
        %v1155 = vtanh.pop %v1091
        %v1156 = vtanh.pop %v1092
        %v1157 = vtanh.pop %v1093
        %v1158 = vtanh.pop %v1094
        %v1159 = vtanh.pop %v1095
        %v1160 = vtanh.pop %v1096
        %v1161 = vtanh.pop %v1097
        %v1162 = vtanh.pop %v1098
        %v1163 = vtanh.pop %v1099
        %v1164 = vtanh.pop %v1100
        %v1165 = vtanh.pop %v1101
        %v1166 = vtanh.pop %v1102
        %v1167 = vtanh.pop %v1103
        %v1168 = vtanh.pop %v1104
        %v1169 = vtanh.pop %v1105
        %v1170 = vtanh.pop %v1106
        %v1171 = vtanh.pop %v1107
        %v1172 = vtanh.pop %v1108
        %v1173 = vtanh.pop %v1109
        %v1174 = vtanh.pop %v1110
        %v1175 = vtanh.pop %v1111
        %v1176 = vtanh.pop %v1112
        %v1177 = vtanh.pop %v1113
        %v1178 = vtanh.pop %v1114
        %v1179 = vtanh.pop %v1115
        %v1180 = vtanh.pop %v1116
        %v1181 = vtanh.pop %v1117
        %v1182 = vtanh.pop %v1118
        %v1183 = vtanh.pop %v1119
        %v1184 = vtanh.pop %v1120
        %v1185 = vtanh.pop %v1121
        %v1186 = vtanh.pop %v1122
        %v1187 = vadd.f32 %v1123, 1.0
        %v1188 = vadd.f32 %v1124, 1.0
        %v1189 = vadd.f32 %v1125, 1.0
        %v1190 = vadd.f32 %v1126, 1.0
        %v1191 = vadd.f32 %v1127, 1.0
        %v1192 = vadd.f32 %v1128, 1.0
        %v1193 = vadd.f32 %v1129, 1.0
        %v1194 = vadd.f32 %v1130, 1.0
        %v1195 = vadd.f32 %v1131, 1.0
        %v1196 = vadd.f32 %v1132, 1.0
        %v1197 = vadd.f32 %v1133, 1.0
        %v1198 = vadd.f32 %v1134, 1.0
        %v1199 = vadd.f32 %v1135, 1.0
        %v1200 = vadd.f32 %v1136, 1.0
        %v1201 = vadd.f32 %v1137, 1.0
        %v1202 = vadd.f32 %v1138, 1.0
        %v1203 = vadd.f32 %v1139, 1.0
        %v1204 = vadd.f32 %v1140, 1.0
        %v1205 = vadd.f32 %v1141, 1.0
        %v1206 = vadd.f32 %v1142, 1.0
        %v1207 = vadd.f32 %v1143, 1.0
        %v1208 = vadd.f32 %v1144, 1.0
        %v1209 = vadd.f32 %v1145, 1.0
        %v1210 = vadd.f32 %v1146, 1.0
        %v1211 = vadd.f32 %v1147, 1.0
        %v1212 = vadd.f32 %v1148, 1.0
        %v1213 = vadd.f32 %v1149, 1.0
        %v1214 = vadd.f32 %v1150, 1.0
        %v1215 = vadd.f32 %v1151, 1.0
        %v1216 = vadd.f32 %v1152, 1.0
        %v1217 = vadd.f32 %v1153, 1.0
        %v1218 = vadd.f32 %v1154, 1.0
        %v1219 = vadd.f32 %v1155, 1.0
        %v1220 = vadd.f32 %v1156, 1.0
        %v1221 = vadd.f32 %v1157, 1.0
        %v1222 = vadd.f32 %v1158, 1.0
        %v1223 = vadd.f32 %v1159, 1.0
        %v1224 = vadd.f32 %v1160, 1.0
        %v1225 = vadd.f32 %v1161, 1.0
        %v1226 = vadd.f32 %v1162, 1.0
        %v1227 = vadd.f32 %v1163, 1.0
        %v1228 = vadd.f32 %v1164, 1.0
        %v1229 = vadd.f32 %v1165, 1.0
        %v1230 = vadd.f32 %v1166, 1.0
        %v1231 = vadd.f32 %v1167, 1.0
        %v1232 = vadd.f32 %v1168, 1.0
        %v1233 = vadd.f32 %v1169, 1.0
        %v1234 = vadd.f32 %v1170, 1.0
        %v1235 = vadd.f32 %v1171, 1.0
        %v1236 = vadd.f32 %v1172, 1.0
        %v1237 = vadd.f32 %v1173, 1.0
        %v1238 = vadd.f32 %v1174, 1.0
        %v1239 = vadd.f32 %v1175, 1.0
        %v1240 = vadd.f32 %v1176, 1.0
        %v1241 = vadd.f32 %v1177, 1.0
        %v1242 = vadd.f32 %v1178, 1.0
        %v1243 = vadd.f32 %v1179, 1.0
        %v1244 = vadd.f32 %v1180, 1.0
        %v1245 = vadd.f32 %v1181, 1.0
        %v1246 = vadd.f32 %v1182, 1.0
        %v1247 = vadd.f32 %v1183, 1.0
        %v1248 = vadd.f32 %v1184, 1.0
        %v1249 = vadd.f32 %v1185, 1.0
        %v1250 = vadd.f32 %v1186, 1.0
        %v1251 = vmul.f32 %v739, %v1187
        %v1252 = vmul.f32 %v740, %v1188
        %v1253 = vmul.f32 %v741, %v1189
        %v1254 = vmul.f32 %v742, %v1190
        %v1255 = vmul.f32 %v743, %v1191
        %v1256 = vmul.f32 %v744, %v1192
        %v1257 = vmul.f32 %v745, %v1193
        %v1258 = vmul.f32 %v746, %v1194
        %v1259 = vmul.f32 %v747, %v1195
        %v1260 = vmul.f32 %v748, %v1196
        %v1261 = vmul.f32 %v749, %v1197
        %v1262 = vmul.f32 %v750, %v1198
        %v1263 = vmul.f32 %v751, %v1199
        %v1264 = vmul.f32 %v752, %v1200
        %v1265 = vmul.f32 %v753, %v1201
        %v1266 = vmul.f32 %v754, %v1202
        %v1267 = vmul.f32 %v755, %v1203
        %v1268 = vmul.f32 %v756, %v1204
        %v1269 = vmul.f32 %v757, %v1205
        %v1270 = vmul.f32 %v758, %v1206
        %v1271 = vmul.f32 %v759, %v1207
        %v1272 = vmul.f32 %v760, %v1208
        %v1273 = vmul.f32 %v761, %v1209
        %v1274 = vmul.f32 %v762, %v1210
        %v1275 = vmul.f32 %v763, %v1211
        %v1276 = vmul.f32 %v764, %v1212
        %v1277 = vmul.f32 %v765, %v1213
        %v1278 = vmul.f32 %v766, %v1214
        %v1279 = vmul.f32 %v767, %v1215
        %v1280 = vmul.f32 %v768, %v1216
        %v1281 = vmul.f32 %v769, %v1217
        %v1282 = vmul.f32 %v770, %v1218
        %v1283 = vmul.f32 %v771, %v1219
        %v1284 = vmul.f32 %v772, %v1220
        %v1285 = vmul.f32 %v773, %v1221
        %v1286 = vmul.f32 %v774, %v1222
        %v1287 = vmul.f32 %v775, %v1223
        %v1288 = vmul.f32 %v776, %v1224
        %v1289 = vmul.f32 %v777, %v1225
        %v1290 = vmul.f32 %v778, %v1226
        %v1291 = vmul.f32 %v779, %v1227
        %v1292 = vmul.f32 %v780, %v1228
        %v1293 = vmul.f32 %v781, %v1229
        %v1294 = vmul.f32 %v782, %v1230
        %v1295 = vmul.f32 %v783, %v1231
        %v1296 = vmul.f32 %v784, %v1232
        %v1297 = vmul.f32 %v785, %v1233
        %v1298 = vmul.f32 %v786, %v1234
        %v1299 = vmul.f32 %v787, %v1235
        %v1300 = vmul.f32 %v788, %v1236
        %v1301 = vmul.f32 %v789, %v1237
        %v1302 = vmul.f32 %v790, %v1238
        %v1303 = vmul.f32 %v791, %v1239
        %v1304 = vmul.f32 %v792, %v1240
        %v1305 = vmul.f32 %v793, %v1241
        %v1306 = vmul.f32 %v794, %v1242
        %v1307 = vmul.f32 %v795, %v1243
        %v1308 = vmul.f32 %v796, %v1244
        %v1309 = vmul.f32 %v797, %v1245
        %v1310 = vmul.f32 %v798, %v1246
        %v1311 = vmul.f32 %v799, %v1247
        %v1312 = vmul.f32 %v800, %v1248
        %v1313 = vmul.f32 %v801, %v1249
        %v1314 = vmul.f32 %v802, %v1250
        %v1315 = vpack.c.bf16 %v1255, %v1251
        %v1316 = vpack.c.bf16 %v1256, %v1252
        %v1317 = vpack.c.bf16 %v1257, %v1253
        %v1318 = vpack.c.bf16 %v1258, %v1254
        %v1319 = vpack.c.bf16 %v1263, %v1259
        %v1320 = vpack.c.bf16 %v1264, %v1260
        %v1321 = vpack.c.bf16 %v1265, %v1261
        %v1322 = vpack.c.bf16 %v1266, %v1262
        %v1323 = vpack.c.bf16 %v1271, %v1267
        %v1324 = vpack.c.bf16 %v1272, %v1268
        %v1325 = vpack.c.bf16 %v1273, %v1269
        %v1326 = vpack.c.bf16 %v1274, %v1270
        %v1327 = vpack.c.bf16 %v1279, %v1275
        %v1328 = vpack.c.bf16 %v1280, %v1276
        %v1329 = vpack.c.bf16 %v1281, %v1277
        %v1330 = vpack.c.bf16 %v1282, %v1278
        %v1331 = vpack.c.bf16 %v1287, %v1283
        %v1332 = vpack.c.bf16 %v1288, %v1284
        %v1333 = vpack.c.bf16 %v1289, %v1285
        %v1334 = vpack.c.bf16 %v1290, %v1286
        %v1335 = vpack.c.bf16 %v1295, %v1291
        %v1336 = vpack.c.bf16 %v1296, %v1292
        %v1337 = vpack.c.bf16 %v1297, %v1293
        %v1338 = vpack.c.bf16 %v1298, %v1294
        %v1339 = vpack.c.bf16 %v1303, %v1299
        %v1340 = vpack.c.bf16 %v1304, %v1300
        %v1341 = vpack.c.bf16 %v1305, %v1301
        %v1342 = vpack.c.bf16 %v1306, %v1302
        %v1343 = vpack.c.bf16 %v1311, %v1307
        %v1344 = vpack.c.bf16 %v1312, %v1308
        %v1345 = vpack.c.bf16 %v1313, %v1309
        %v1346 = vpack.c.bf16 %v1314, %v1310
        %v1347 = vld [vmem:[#allocation7] sm:$0xf]
        %v1348 = vld [vmem:[#allocation7 + $0x4] sm:$0xf]
        %v1349 = vld [vmem:[#allocation7 + $0x8] sm:$0xf]
        %v1350 = vld [vmem:[#allocation7 + $0xc] sm:$0xf]
        %v1351 = vld [vmem:[#allocation7 + $0x10] sm:$0xf]
        %v1352 = vld [vmem:[#allocation7 + $0x14] sm:$0xf]
        %v1353 = vld [vmem:[#allocation7 + $0x18] sm:$0xf]
        %v1354 = vld [vmem:[#allocation7 + $0x1c] sm:$0xf]
        %v1355 = vld [vmem:[#allocation7 + $0x20] sm:$0xf]
        %v1356 = vld [vmem:[#allocation7 + $0x24] sm:$0xf]
        %v1357 = vld [vmem:[#allocation7 + $0x28] sm:$0xf]
        %v1358 = vld [vmem:[#allocation7 + $0x2c] sm:$0xf]
        %v1359 = vld [vmem:[#allocation7 + $0x30] sm:$0xf]
        %v1360 = vld [vmem:[#allocation7 + $0x34] sm:$0xf]
        %v1361 = vld [vmem:[#allocation7 + $0x38] sm:$0xf]
        %v1362 = vld [vmem:[#allocation7 + $0x3c] sm:$0xf]
        %v1363 = vld [vmem:[#allocation7 + $0x40] sm:$0xf]
        %v1364 = vld [vmem:[#allocation7 + $0x44] sm:$0xf]
        %v1365 = vld [vmem:[#allocation7 + $0x48] sm:$0xf]
        %v1366 = vld [vmem:[#allocation7 + $0x4c] sm:$0xf]
        %v1367 = vld [vmem:[#allocation7 + $0x50] sm:$0xf]
        %v1368 = vld [vmem:[#allocation7 + $0x54] sm:$0xf]
        %v1369 = vld [vmem:[#allocation7 + $0x58] sm:$0xf]
        %v1370 = vld [vmem:[#allocation7 + $0x5c] sm:$0xf]
        %v1371 = vld [vmem:[#allocation7 + $0x60] sm:$0xf]
        %v1372 = vld [vmem:[#allocation7 + $0x64] sm:$0xf]
        %v1373 = vld [vmem:[#allocation7 + $0x68] sm:$0xf]
        %v1374 = vld [vmem:[#allocation7 + $0x6c] sm:$0xf]
        %v1375 = vld [vmem:[#allocation7 + $0x70] sm:$0xf]
        %v1376 = vld [vmem:[#allocation7 + $0x74] sm:$0xf]
        %v1377 = vld [vmem:[#allocation7 + $0x78] sm:$0xf]
        %v1378 = vld [vmem:[#allocation7 + $0x7c] sm:$0xf]
        %v1379 = vld [vmem:[#allocation7 + $0x80] sm:$0xf]
        %v1380 = vld [vmem:[#allocation7 + $0x84] sm:$0xf]
        %v1381 = vld [vmem:[#allocation7 + $0x88] sm:$0xf]
        %v1382 = vld [vmem:[#allocation7 + $0x8c] sm:$0xf]
        %v1383 = vld [vmem:[#allocation7 + $0x90] sm:$0xf]
        %v1384 = vld [vmem:[#allocation7 + $0x94] sm:$0xf]
        %v1385 = vld [vmem:[#allocation7 + $0x98] sm:$0xf]
        %v1386 = vld [vmem:[#allocation7 + $0x9c] sm:$0xf]
        %v1387 = vld [vmem:[#allocation7 + $0xa0] sm:$0xf]
        %v1388 = vld [vmem:[#allocation7 + $0xa4] sm:$0xf]
        %v1389 = vld [vmem:[#allocation7 + $0xa8] sm:$0xf]
        %v1390 = vld [vmem:[#allocation7 + $0xac] sm:$0xf]
        %v1391 = vld [vmem:[#allocation7 + $0xb0] sm:$0xf]
        %v1392 = vld [vmem:[#allocation7 + $0xb4] sm:$0xf]
        %v1393 = vld [vmem:[#allocation7 + $0xb8] sm:$0xf]
        %v1394 = vld [vmem:[#allocation7 + $0xbc] sm:$0xf]
        %v1395 = vld [vmem:[#allocation7 + $0xc0] sm:$0xf]
        %v1396 = vld [vmem:[#allocation7 + $0xc4] sm:$0xf]
        %v1397 = vld [vmem:[#allocation7 + $0xc8] sm:$0xf]
        %v1398 = vld [vmem:[#allocation7 + $0xcc] sm:$0xf]
        %v1399 = vld [vmem:[#allocation7 + $0xd0] sm:$0xf]
        %v1400 = vld [vmem:[#allocation7 + $0xd4] sm:$0xf]
        %v1401 = vld [vmem:[#allocation7 + $0xd8] sm:$0xf]
        %v1402 = vld [vmem:[#allocation7 + $0xdc] sm:$0xf]
        %v1403 = vld [vmem:[#allocation7 + $0xe0] sm:$0xf]
        %v1404 = vld [vmem:[#allocation7 + $0xe4] sm:$0xf]
        %v1405 = vld [vmem:[#allocation7 + $0xe8] sm:$0xf]
        %v1406 = vld [vmem:[#allocation7 + $0xec] sm:$0xf]
        %v1407 = vld [vmem:[#allocation7 + $0xf0] sm:$0xf]
        %v1408 = vld [vmem:[#allocation7 + $0xf4] sm:$0xf]
        %v1409 = vld [vmem:[#allocation7 + $0xf8] sm:$0xf]
        %v1410 = vld [vmem:[#allocation7 + $0xfc] sm:$0xf]
        %v1411 = vld [vmem:[%s4] sm:$0x1]
        %v1413 = vlaneseq
        %v1414 = vshrl.u32 %v1413, 7
        %v1415 = vsub.s32 0, %v1414
        %v1416 = vrot.slane %v1411, %v1415
        %v1482 = vunpack.c.l.b16 %v1347
        %v1483 = vunpack.c.l.b16 %v1348
        %v1484 = vunpack.c.l.b16 %v1349
        %v1485 = vunpack.c.l.b16 %v1350
        %v1486 = vunpack.c.l.b16 %v1351
        %v1487 = vunpack.c.l.b16 %v1352
        %v1488 = vunpack.c.l.b16 %v1353
        %v1489 = vunpack.c.l.b16 %v1354
        %v1490 = vunpack.c.l.b16 %v1355
        %v1491 = vunpack.c.l.b16 %v1356
        %v1492 = vunpack.c.l.b16 %v1357
        %v1493 = vunpack.c.l.b16 %v1358
        %v1494 = vunpack.c.l.b16 %v1359
        %v1495 = vunpack.c.l.b16 %v1360
        %v1496 = vunpack.c.l.b16 %v1361
        %v1497 = vunpack.c.l.b16 %v1362
        %v1498 = vunpack.c.l.b16 %v1363
        %v1499 = vunpack.c.l.b16 %v1364
        %v1500 = vunpack.c.l.b16 %v1365
        %v1501 = vunpack.c.l.b16 %v1366
        %v1502 = vunpack.c.l.b16 %v1367
        %v1503 = vunpack.c.l.b16 %v1368
        %v1504 = vunpack.c.l.b16 %v1369
        %v1505 = vunpack.c.l.b16 %v1370
        %v1506 = vunpack.c.l.b16 %v1371
        %v1507 = vunpack.c.l.b16 %v1372
        %v1508 = vunpack.c.l.b16 %v1373
        %v1509 = vunpack.c.l.b16 %v1374
        %v1510 = vunpack.c.l.b16 %v1375
        %v1511 = vunpack.c.l.b16 %v1376
        %v1512 = vunpack.c.l.b16 %v1377
        %v1513 = vunpack.c.l.b16 %v1378
        %v1514 = vunpack.c.l.b16 %v1379
        %v1515 = vunpack.c.l.b16 %v1380
        %v1516 = vunpack.c.l.b16 %v1381
        %v1517 = vunpack.c.l.b16 %v1382
        %v1518 = vunpack.c.l.b16 %v1383
        %v1519 = vunpack.c.l.b16 %v1384
        %v1520 = vunpack.c.l.b16 %v1385
        %v1521 = vunpack.c.l.b16 %v1386
        %v1522 = vunpack.c.l.b16 %v1387
        %v1523 = vunpack.c.l.b16 %v1388
        %v1524 = vunpack.c.l.b16 %v1389
        %v1525 = vunpack.c.l.b16 %v1390
        %v1526 = vunpack.c.l.b16 %v1391
        %v1527 = vunpack.c.l.b16 %v1392
        %v1528 = vunpack.c.l.b16 %v1393
        %v1529 = vunpack.c.l.b16 %v1394
        %v1530 = vunpack.c.l.b16 %v1395
        %v1531 = vunpack.c.l.b16 %v1396
        %v1532 = vunpack.c.l.b16 %v1397
        %v1533 = vunpack.c.l.b16 %v1398
        %v1534 = vunpack.c.l.b16 %v1399
        %v1535 = vunpack.c.l.b16 %v1400
        %v1536 = vunpack.c.l.b16 %v1401
        %v1537 = vunpack.c.l.b16 %v1402
        %v1538 = vunpack.c.l.b16 %v1403
        %v1539 = vunpack.c.l.b16 %v1404
        %v1540 = vunpack.c.l.b16 %v1405
        %v1541 = vunpack.c.l.b16 %v1406
        %v1542 = vunpack.c.l.b16 %v1407
        %v1543 = vunpack.c.l.b16 %v1408
        %v1544 = vunpack.c.l.b16 %v1409
        %v1545 = vunpack.c.l.b16 %v1410
        %v1546 = vpack.c.b16 %v1483, %v1482
        %v1547 = vpack.c.b16 %v1485, %v1484
        %v1548 = vpack.c.b16 %v1487, %v1486
        %v1549 = vpack.c.b16 %v1489, %v1488
        %v1550 = vpack.c.b16 %v1491, %v1490
        %v1551 = vpack.c.b16 %v1493, %v1492
        %v1552 = vpack.c.b16 %v1495, %v1494
        %v1553 = vpack.c.b16 %v1497, %v1496
        %v1554 = vpack.c.b16 %v1499, %v1498
        %v1555 = vpack.c.b16 %v1501, %v1500
        %v1556 = vpack.c.b16 %v1503, %v1502
        %v1557 = vpack.c.b16 %v1505, %v1504
        %v1558 = vpack.c.b16 %v1507, %v1506
        %v1559 = vpack.c.b16 %v1509, %v1508
        %v1560 = vpack.c.b16 %v1511, %v1510
        %v1561 = vpack.c.b16 %v1513, %v1512
        %v1562 = vpack.c.b16 %v1515, %v1514
        %v1563 = vpack.c.b16 %v1517, %v1516
        %v1564 = vpack.c.b16 %v1519, %v1518
        %v1565 = vpack.c.b16 %v1521, %v1520
        %v1566 = vpack.c.b16 %v1523, %v1522
        %v1567 = vpack.c.b16 %v1525, %v1524
        %v1568 = vpack.c.b16 %v1527, %v1526
        %v1569 = vpack.c.b16 %v1529, %v1528
        %v1570 = vpack.c.b16 %v1531, %v1530
        %v1571 = vpack.c.b16 %v1533, %v1532
        %v1572 = vpack.c.b16 %v1535, %v1534
        %v1573 = vpack.c.b16 %v1537, %v1536
        %v1574 = vpack.c.b16 %v1539, %v1538
        %v1575 = vpack.c.b16 %v1541, %v1540
        %v1576 = vpack.c.b16 %v1543, %v1542
        %v1577 = vpack.c.b16 %v1545, %v1544
        %1610 = vmatprep.subr.bf16.mxu0 0
        %1611 = vmatpush1.bf16.msra.mxu0 %v1546
        %1612 = vmatprep.subr.bf16.mxu0 0
        %1613 = vmatpush1.bf16.msra.mxu0 %v1547
        %1614 = vmatprep.subr.bf16.mxu0 0
        %1615 = vmatpush1.bf16.msra.mxu0 %v1548
        %1616 = vmatprep.subr.bf16.mxu0 0
        %1617 = vmatpush1.bf16.msra.mxu0 %v1549
        %1618 = vmatprep.subr.bf16.mxu0 0
        %1619 = vmatpush1.bf16.msra.mxu0 %v1550
        %1620 = vmatprep.subr.bf16.mxu0 0
        %1621 = vmatpush1.bf16.msra.mxu0 %v1551
        %1622 = vmatprep.subr.bf16.mxu0 0
        %1623 = vmatpush1.bf16.msra.mxu0 %v1552
        %1624 = vmatprep.subr.bf16.mxu0 0
        %1625 = vmatpush1.bf16.msra.mxu0 %v1553
        %1626 = vmatprep.subr.bf16.mxu0 0
        %1627 = vmatpush1.bf16.msra.mxu0 %v1554
        %1628 = vmatprep.subr.bf16.mxu0 0
        %1629 = vmatpush1.bf16.msra.mxu0 %v1555
        %1630 = vmatprep.subr.bf16.mxu0 0
        %1631 = vmatpush1.bf16.msra.mxu0 %v1556
        %1632 = vmatprep.subr.bf16.mxu0 0
        %1633 = vmatpush1.bf16.msra.mxu0 %v1557
        %1634 = vmatprep.subr.bf16.mxu0 0
        %1635 = vmatpush1.bf16.msra.mxu0 %v1558
        %1636 = vmatprep.subr.bf16.mxu0 0
        %1637 = vmatpush1.bf16.msra.mxu0 %v1559
        %1638 = vmatprep.subr.bf16.mxu0 0
        %1639 = vmatpush1.bf16.msra.mxu0 %v1560
        %1640 = vmatprep.subr.bf16.mxu0 0
        %1641 = vmatpush1.bf16.msra.mxu0 %v1561
        %1642 = vmatprep.mubr.bf16.mxu0 %v1316
        %1643 = vmatmul.mubr.bf16.gmra.mrb[0].mxu0 %v1315
        %v1644 = vpop.f32.mrb[0].mxu0
        %v1645 = vadd.f32 %v1416, %v1644
        %v1646 = vpop.f32.mrb[0].mxu0
        %v1647 = vpop.f32.mrb[0].mxu0
        %v1648 = vadd.f32 %v1416, %v1647
        %v1649 = vpop.f32.mrb[0].mxu0
        %1650 = vmatprep.mubr.bf16.mxu0 %v1320
        %1651 = vmatmul.mubr.bf16.gmra.mrb[0].mxu0 %v1319
        %v1652 = vpop.f32.mrb[0].mxu0
        %v1653 = vadd.f32 %v1416, %v1652
        %v1654 = vpop.f32.mrb[0].mxu0
        %v1655 = vpop.f32.mrb[0].mxu0
        %v1656 = vadd.f32 %v1416, %v1655
        %v1657 = vpop.f32.mrb[0].mxu0
        %1658 = vmatprep.mubr.bf16.mxu0 %v1324
        %1659 = vmatmul.mubr.bf16.gmra.mrb[0].mxu0 %v1323
        %v1660 = vpop.f32.mrb[0].mxu0
        %v1661 = vadd.f32 %v1416, %v1660
        %v1662 = vpop.f32.mrb[0].mxu0
        %v1663 = vpop.f32.mrb[0].mxu0
        %v1664 = vadd.f32 %v1416, %v1663
        %v1665 = vpop.f32.mrb[0].mxu0
        %1666 = vmatprep.mubr.bf16.mxu0 %v1328
        %1667 = vmatmul.mubr.bf16.gmra.mrb[0].mxu0 %v1327
        %v1668 = vpop.f32.mrb[0].mxu0
        %v1669 = vadd.f32 %v1416, %v1668
        %v1670 = vpop.f32.mrb[0].mxu0
        %v1671 = vpop.f32.mrb[0].mxu0
        %v1672 = vadd.f32 %v1416, %v1671
        %v1673 = vpop.f32.mrb[0].mxu0
        %1674 = vmatprep.mubr.bf16.mxu0 %v1332
        %1675 = vmatmul.mubr.bf16.gmra.mrb[0].mxu0 %v1331
        %v1676 = vpop.f32.mrb[0].mxu0
        %v1677 = vadd.f32 %v1416, %v1676
        %v1678 = vpop.f32.mrb[0].mxu0
        %v1679 = vpop.f32.mrb[0].mxu0
        %v1680 = vadd.f32 %v1416, %v1679
        %v1681 = vpop.f32.mrb[0].mxu0
        %1682 = vmatprep.mubr.bf16.mxu0 %v1336
        %1683 = vmatmul.mubr.bf16.gmra.mrb[0].mxu0 %v1335
        %v1684 = vpop.f32.mrb[0].mxu0
        %v1685 = vadd.f32 %v1416, %v1684
        %v1686 = vpop.f32.mrb[0].mxu0
        %v1687 = vpop.f32.mrb[0].mxu0
        %v1688 = vadd.f32 %v1416, %v1687
        %v1689 = vpop.f32.mrb[0].mxu0
        %1690 = vmatprep.mubr.bf16.mxu0 %v1340
        %1691 = vmatmul.mubr.bf16.gmra.mrb[0].mxu0 %v1339
        %v1692 = vpop.f32.mrb[0].mxu0
        %v1693 = vadd.f32 %v1416, %v1692
        %v1694 = vpop.f32.mrb[0].mxu0
        %v1695 = vpop.f32.mrb[0].mxu0
        %v1696 = vadd.f32 %v1416, %v1695
        %v1697 = vpop.f32.mrb[0].mxu0
        %1698 = vmatprep.mubr.bf16.mxu0 %v1344
        %1699 = vmatmul.mubr.bf16.gmra.mrb[0].mxu0 %v1343
        %v1700 = vpop.f32.mrb[0].mxu0
        %v1701 = vadd.f32 %v1416, %v1700
        %v1702 = vpop.f32.mrb[0].mxu0
        %v1703 = vpop.f32.mrb[0].mxu0
        %v1704 = vadd.f32 %v1416, %v1703
        %v1705 = vpop.f32.mrb[0].mxu0
        %1706 = vdwg.mxu0
        %1707 = vmatprep.subr.bf16.mxu0 0
        %1708 = vmatpush1.bf16.msra.mxu0 %v1562
        %1709 = vmatprep.subr.bf16.mxu0 0
        %1710 = vmatpush1.bf16.msra.mxu0 %v1563
        %1711 = vmatprep.subr.bf16.mxu0 0
        %1712 = vmatpush1.bf16.msra.mxu0 %v1564
        %1713 = vmatprep.subr.bf16.mxu0 0
        %1714 = vmatpush1.bf16.msra.mxu0 %v1565
        %1715 = vmatprep.subr.bf16.mxu0 0
        %1716 = vmatpush1.bf16.msra.mxu0 %v1566
        %1717 = vmatprep.subr.bf16.mxu0 0
        %1718 = vmatpush1.bf16.msra.mxu0 %v1567
        %1719 = vmatprep.subr.bf16.mxu0 0
        %1720 = vmatpush1.bf16.msra.mxu0 %v1568
        %1721 = vmatprep.subr.bf16.mxu0 0
        %1722 = vmatpush1.bf16.msra.mxu0 %v1569
        %1723 = vmatprep.subr.bf16.mxu0 0
        %1724 = vmatpush1.bf16.msra.mxu0 %v1570
        %1725 = vmatprep.subr.bf16.mxu0 0
        %1726 = vmatpush1.bf16.msra.mxu0 %v1571
        %1727 = vmatprep.subr.bf16.mxu0 0
        %1728 = vmatpush1.bf16.msra.mxu0 %v1572
        %1729 = vmatprep.subr.bf16.mxu0 0
        %1730 = vmatpush1.bf16.msra.mxu0 %v1573
        %1731 = vmatprep.subr.bf16.mxu0 0
        %1732 = vmatpush1.bf16.msra.mxu0 %v1574
        %1733 = vmatprep.subr.bf16.mxu0 0
        %1734 = vmatpush1.bf16.msra.mxu0 %v1575
        %1735 = vmatprep.subr.bf16.mxu0 0
        %1736 = vmatpush1.bf16.msra.mxu0 %v1576
        %1737 = vmatprep.subr.bf16.mxu0 0
        %1738 = vmatpush1.bf16.msra.mxu0 %v1577
        %1739 = vmatprep.mubr.bf16.mxu0 %v1318
        %1740 = vmatmul.mubr.bf16.gmra.mrb[0].mxu0 %v1317
        %v1741 = vpop.f32.mrb[0].mxu0
        %v1742 = vadd.f32 %v1645, %v1741
        %v1743 = vpop.f32.mrb[0].mxu0
        %v1744 = vpop.f32.mrb[0].mxu0
        %v1745 = vadd.f32 %v1648, %v1744
        %v1746 = vpop.f32.mrb[0].mxu0
        %1747 = vmatprep.mubr.bf16.mxu0 %v1322
        %1748 = vmatmul.mubr.bf16.gmra.mrb[0].mxu0 %v1321
        %v1749 = vpop.f32.mrb[0].mxu0
        %v1750 = vadd.f32 %v1653, %v1749
        %v1751 = vpop.f32.mrb[0].mxu0
        %v1752 = vpop.f32.mrb[0].mxu0
        %v1753 = vadd.f32 %v1656, %v1752
        %v1754 = vpop.f32.mrb[0].mxu0
        %1755 = vmatprep.mubr.bf16.mxu0 %v1326
        %1756 = vmatmul.mubr.bf16.gmra.mrb[0].mxu0 %v1325
        %v1757 = vpop.f32.mrb[0].mxu0
        %v1758 = vadd.f32 %v1661, %v1757
        %v1759 = vpop.f32.mrb[0].mxu0
        %v1760 = vpop.f32.mrb[0].mxu0
        %v1761 = vadd.f32 %v1664, %v1760
        %v1762 = vpop.f32.mrb[0].mxu0
        %1763 = vmatprep.mubr.bf16.mxu0 %v1330
        %1764 = vmatmul.mubr.bf16.gmra.mrb[0].mxu0 %v1329
        %v1765 = vpop.f32.mrb[0].mxu0
        %v1766 = vadd.f32 %v1669, %v1765
        %v1767 = vpop.f32.mrb[0].mxu0
        %v1768 = vpop.f32.mrb[0].mxu0
        %v1769 = vadd.f32 %v1672, %v1768
        %v1770 = vpop.f32.mrb[0].mxu0
        %1771 = vmatprep.mubr.bf16.mxu0 %v1334
        %1772 = vmatmul.mubr.bf16.gmra.mrb[0].mxu0 %v1333
        %v1773 = vpop.f32.mrb[0].mxu0
        %v1774 = vadd.f32 %v1677, %v1773
        %v1775 = vpop.f32.mrb[0].mxu0
        %v1776 = vpop.f32.mrb[0].mxu0
        %v1777 = vadd.f32 %v1680, %v1776
        %v1778 = vpop.f32.mrb[0].mxu0
        %1779 = vmatprep.mubr.bf16.mxu0 %v1338
        %1780 = vmatmul.mubr.bf16.gmra.mrb[0].mxu0 %v1337
        %v1781 = vpop.f32.mrb[0].mxu0
        %v1782 = vadd.f32 %v1685, %v1781
        %v1783 = vpop.f32.mrb[0].mxu0
        %v1784 = vpop.f32.mrb[0].mxu0
        %v1785 = vadd.f32 %v1688, %v1784
        %v1786 = vpop.f32.mrb[0].mxu0
        %1787 = vmatprep.mubr.bf16.mxu0 %v1342
        %1788 = vmatmul.mubr.bf16.gmra.mrb[0].mxu0 %v1341
        %v1789 = vpop.f32.mrb[0].mxu0
        %v1790 = vadd.f32 %v1693, %v1789
        %v1791 = vpop.f32.mrb[0].mxu0
        %v1792 = vpop.f32.mrb[0].mxu0
        %v1793 = vadd.f32 %v1696, %v1792
        %v1794 = vpop.f32.mrb[0].mxu0
        %1795 = vmatprep.mubr.bf16.mxu0 %v1346
        %1796 = vmatmul.mubr.bf16.gmra.mrb[0].mxu0 %v1345
        %v1797 = vpop.f32.mrb[0].mxu0
        %v1798 = vadd.f32 %v1701, %v1797
        %v1799 = vpop.f32.mrb[0].mxu0
        %v1800 = vpop.f32.mrb[0].mxu0
        %v1801 = vadd.f32 %v1704, %v1800
        %v1802 = vpop.f32.mrb[0].mxu0
        %1803 = vdwg.mxu0
        %1804 = vst [vmem:[%s271] sm:$0xff] %v1742
        %1805 = vst [vmem:[%s271 + $0x8] sm:$0xff] %v1745
        %1806 = vst [vmem:[%s271 + $0x10] sm:$0xff] %v1750
        %1807 = vst [vmem:[%s271 + $0x18] sm:$0xff] %v1753
        %1808 = vst [vmem:[%s271 + $0x20] sm:$0xff] %v1758
        %1809 = vst [vmem:[%s271 + $0x28] sm:$0xff] %v1761
        %1810 = vst [vmem:[%s271 + $0x30] sm:$0xff] %v1766
        %1811 = vst [vmem:[%s271 + $0x38] sm:$0xff] %v1769
        %1812 = vst [vmem:[%s271 + $0x40] sm:$0xff] %v1774
        %1813 = vst [vmem:[%s271 + $0x48] sm:$0xff] %v1777
        %1814 = vst [vmem:[%s271 + $0x50] sm:$0xff] %v1782
        %1815 = vst [vmem:[%s271 + $0x58] sm:$0xff] %v1785
        %1816 = vst [vmem:[%s271 + $0x60] sm:$0xff] %v1790
        %1817 = vst [vmem:[%s271 + $0x68] sm:$0xff] %v1793
        %1818 = vst [vmem:[%s271 + $0x70] sm:$0xff] %v1798
        %1819 = vst [vmem:[%s271 + $0x78] sm:$0xff] %v1801
        %s1820 = sand.u32 %s141, 1
        %s1821 = scalar_lea.sflag [#allocation4], %s1820
        %s1822 = sand.u32 %s141, 1
        %s1823 = smul.addr %s1822, 128
        %s1824 = scalar_lea.vmem [#allocation8], %s1823
        // Predicated region
        $region53: #{tpu_custom_call.1} parent=39 // pred_check
          %p1825 = pneg %p151
        $region54: #{tpu_custom_call.1} parent=39 // pred_check_branch
          %1827 = sbr.rel (%p1825) target = $region56
        $region55: #{tpu_custom_call.1} parent=39 // pred_region
          %s1828 = smul.u32 16, %s23
          %s1830 = ssub.s32 2048, 2048
          %1831 = vsyncadd %s1821, %s1830
          %s1832 = smul.addr %s1828, 128
          %s1833 = scalar_lea.hbm %s5, %s1832
          %s1834 = sshll.u32 %s1824, 4
          %s1835 = int_to_ptr.vmem [resolvable:$true] %s1834
          %1840 = dma.vmem_to_hbm [thread:$0]  %s1835, 2048, %s1833, %s1821, 128, 128, 8
        $region56: #{tpu_custom_call.1} parent=39 // pred_fallthru
          _
      $region40: #{tpu_custom_call.1} parent=5 // pred_fallthru
        _
      %p1841 = scmp.le.s32.totalorder 2, %s18
      // Predicated region
      $region57: #{tpu_custom_call.1} parent=5 // pred_check
        %p1842 = pneg %p1841
      $region58: #{tpu_custom_call.1} parent=5 // pred_check_branch
        %1844 = sbr.rel (%p1842) target = $region60
      $region59: #{tpu_custom_call.1} parent=5 // pred_region
        %s1845 = ssub.s32 %s18, 2
        // Predicated region
        $region61: #{tpu_custom_call.1} parent=59 // pred_check
          %p1846 = pneg %p157
        $region62: #{tpu_custom_call.1} parent=59 // pred_check_branch
          %1848 = sbr.rel (%p1846) target = $region64
        $region63: #{tpu_custom_call.1} parent=59 // pred_region
          %s1849 = sand.u32 %s142, 1
          %s1850 = scalar_lea.sflag [#allocation4], %s1849
          %s1851 = sand.u32 %s142, 1
          %s1852 = smul.addr %s1851, 128
          %s1853 = scalar_lea.vmem [#allocation8], %s1852
          %1854 = dma.done %s1850, 2048
        $region64: #{tpu_custom_call.1} parent=59 // pred_fallthru
          _
      $region60: #{tpu_custom_call.1} parent=5 // pred_fallthru
        _
    $region6: #{tpu_custom_call.1} parent=1 // loop_footer
      %s22 = sadd.s32 1, %s18
    $region7: #{tpu_custom_call.1} parent=1 // loop_footer_branch
      %17 = sbr.rel target = $region3
    $region8: #{tpu_custom_call.1} parent=1 // loop_exit
      _
    %1855 = vsyncpa [#allocation3], 1
    %s1856 = scalar_lea.sflag [#allocation3], 1
    %1857 = vsyncpa %s1856, 1
    %1858 = vsyncpa [#allocation6], 1
    %1859 = vsyncpa [#allocation4], 1
    %s1860 = scalar_lea.sflag [#allocation4], 1
    %1861 = vsyncpa %s1860, 1

</llo_original>
